<compile_context>
chip_gen: v5e
topology: v5e:2x2
jax: 0.10.0
libtpu: 0.0.40
codegen_flags: <defaults>
</compile_context>

<pallas_src>
import functools

import jax
import jax.numpy as jnp
from jax.experimental import pallas as pl
from jax.experimental.pallas import tpu as pltpu


def _fused_conv_block_kernel(x_ref, w_ref, b_ref, w1_ref, b1_ref, w2t_ref, b2_ref, out_ref,
                             *, kh_size, kw_size, th, nb, w_out, inv_hw):
    """One sample: banded im2col conv + folded BN(eval) + ReLU + SE squeeze/excite/gating.

    x_ref   : (Cin, Hp, Wp)      zero-padded input sample (bf16)
    w_ref   : (Cout, KH*KW*Cin)  conv weights with BN scale folded in (bf16)
    b_ref   : (Cout, 1)          folded BN bias (f32)
    w1_ref  : (Cout, Cr)         SE fc1 weight (f32)
    b1_ref  : (1, Cr)            SE fc1 bias (f32)
    w2t_ref : (Cout, Cr)         SE fc2 weight, transposed (f32)
    b2_ref  : (Cout, 1)          SE fc2 bias (f32)
    out_ref : (Cout, H*W)        gated output (f32); resident in VMEM, flushed to HBM once
    """
    xs = x_ref[...]                                   # whole padded sample (resident block)
    cin = xs.shape[0]
    cout = out_ref.shape[0]
    m = th * w_out
    w = w_ref[...]                                    # hoist constant operands out of the loop
    bias = b_ref[...]

    ch_sum = jnp.zeros((cout, 1), jnp.float32)
    for band in range(nb):                            # static band loop (nb kept small by sizing)
        r0 = band * th
        # im2col: build one (KH*KW*Cin, TH*W) patch so the band is a single MXU matmul
        # instead of KH*KW tiny K=Cin matmuls + VALU accumulate adds.
        taps = []
        for dh in range(kh_size):
            for dw in range(kw_size):
                taps.append(xs[:, r0 + dh:r0 + dh + th, dw:dw + w_out].reshape(cin, m))
        patch = jnp.concatenate(taps, axis=0)         # (K, TH*W) bf16
        acc = jnp.dot(w, patch, preferred_element_type=jnp.float32)   # (Cout, TH*W) f32
        y = jnp.maximum(acc + bias, 0.0)              # folded BN + ReLU
        out_ref[:, r0 * w_out:r0 * w_out + m] = y     # static, lane-dense store
        ch_sum = ch_sum + jnp.sum(y, axis=1, keepdims=True)

    # SE block, all f32 on tiny (Cout, Cr)-shaped tensors: broadcast-multiply + reductions,
    # no in-kernel transposes or 1-row matmuls.
    pooled = ch_sum * inv_hw                                                      # (Cout, 1)
    z = jnp.maximum(jnp.sum(pooled * w1_ref[...], axis=0, keepdims=True)
                    + b1_ref[...], 0.0)                                           # (1, Cr)
    logits = jnp.sum(w2t_ref[...] * z, axis=1, keepdims=True) + b2_ref[...]       # (Cout, 1)
    gate = 1.0 / (1.0 + jnp.exp(-logits))                                         # sigmoid
    out_ref[...] = out_ref[...] * gate                # channel gating in VMEM; single HBM write


def _pick_band_height(h, w, k_dim, itemsize=2, patch_budget_bytes=4 << 20):
    """Largest divisor th of h whose im2col patch fits the budget, preferring lane-dense th*w."""
    divisors = [t for t in range(1, h + 1) if h % t == 0]
    fits = [t for t in divisors if k_dim * t * w * itemsize <= patch_budget_bytes]
    if not fits:
        return 1
    lane_dense = [t for t in fits if (t * w) % 128 == 0]
    return max(lane_dense) if lane_dense else max(fits)


def conv_block_forward(x_nchw, params, kernel_size=3, stride=1, *,
                       block_h=None, compute_dtype=jnp.bfloat16, bn_eps=1e-5):
    """ConvBlock forward (eval mode).  x_nchw: (N, Cin, H, W) f32 -> (N, Cout, H, W) f32."""
    # TODO(synk): stride > 1, preactivation=True, dim='3d', batch_norm=False / use_se=False
    # module-config variants are not wired up.
    assert stride == 1, "only stride=1 is implemented"

    w_conv = params["w_conv"]                     # (Cout, Cin, KH, KW)  PyTorch OIHW layout
    gamma, beta = params["bn_gamma"], params["bn_beta"]
    rmean, rvar = params["bn_mean"], params["bn_var"]
    w1, b1 = params["se_w1"], params["se_b1"]     # (Cout, Cr), (Cr,)
    w2, b2 = params["se_w2"], params["se_b2"]     # (Cr, Cout), (Cout,)

    N, Cin, H, W = x_nchw.shape
    Cout, _, KH, KW = w_conv.shape
    Cr = w1.shape[1]
    k_dim = KH * KW * Cin

    # ConstantPad2d from the module: total padding = kernel_size - stride.
    # (Asymmetric odd-padding branch matches the module's (pad%2, pad-pad%2) ordering; only the
    #  even-padding K=3 path is exercised by the check below.)
    padding = kernel_size - stride
    lo = padding // 2 if padding % 2 == 0 else padding % 2
    hi = padding - lo
    Hp, Wp = H + padding, W + padding

    # Row-band height: as large as the patch budget allows, preferring lane-dense TH*W.
    th = block_h if block_h is not None else _pick_band_height(H, W, k_dim)
    if th is None or th <= 0 or H % th != 0:
        th = H
    nb = H // th

    # Spatial zero-pad only (NO per-band halo duplication in HBM); bf16 matmul operands.
    x_pad = jnp.pad(x_nchw.astype(compute_dtype), ((0, 0), (0, 0), (lo, hi), (lo, hi)))

    # Fold eval-mode BatchNorm scale into the conv weights (exact in real arithmetic);
    # keep the folded bias separate in f32.  K ordered (kh, kw, cin) to match the im2col.
    bn_scale = gamma / jnp.sqrt(rvar + bn_eps)
    w2d = (jnp.transpose(w_conv, (0, 2, 3, 1)).reshape(Cout, k_dim)
           * bn_scale[:, None]).astype(compute_dtype)                    # (Cout, K) bf16
    bias = (beta - rmean * bn_scale).astype(jnp.float32).reshape(Cout, 1)

    # SE parameters, laid out so the in-kernel excite is broadcast-multiply + reductions only.
    se_w1 = w1.astype(jnp.float32)                     # (Cout, Cr)
    se_b1 = b1.astype(jnp.float32).reshape(1, Cr)
    se_w2t = jnp.transpose(w2).astype(jnp.float32)     # (Cout, Cr)
    se_b2 = b2.astype(jnp.float32).reshape(Cout, 1)

    hw = H * W
    kern = functools.partial(_fused_conv_block_kernel, kh_size=KH, kw_size=KW,
                             th=th, nb=nb, w_out=W, inv_hw=1.0 / hw)

    out_flat = pl.pallas_call(
        kern,
        grid=(N,),
        in_specs=[
            pl.BlockSpec((None, Cin, Hp, Wp), lambda n: (n, 0, 0, 0)),   # per-sample padded input
            pl.BlockSpec((Cout, k_dim), lambda n: (0, 0)),
            pl.BlockSpec((Cout, 1), lambda n: (0, 0)),
            pl.BlockSpec((Cout, Cr), lambda n: (0, 0)),
            pl.BlockSpec((1, Cr), lambda n: (0, 0)),
            pl.BlockSpec((Cout, Cr), lambda n: (0, 0)),
            pl.BlockSpec((Cout, 1), lambda n: (0, 0)),
        ],
        out_specs=pl.BlockSpec((None, Cout, hw), lambda n: (n, 0, 0)),
        out_shape=jax.ShapeDtypeStruct((N, Cout, hw), jnp.float32),
        compiler_params=pltpu.CompilerParams(
            dimension_semantics=("parallel",),
            # Budgeted under v7x's 64 MiB physical VMEM (v5e/v6e have 128 MiB headroom).
            vmem_limit_bytes=48 * 1024 * 1024),
    )(x_pad, w2d, bias, se_w1, se_b1, se_w2t, se_b2)

    return out_flat.reshape(N, Cout, H, W)


def _reference_forward(x, params, kernel_size, stride, compute_dtype, bn_eps=1e-5):
    """Pure-JAX reference: same BN-folded, bf16-rounded conv operands; f32 elsewhere."""
    scale = params["bn_gamma"] / jnp.sqrt(params["bn_var"] + bn_eps)
    bias = params["bn_beta"] - params["bn_mean"] * scale
    wq = (params["w_conv"] * scale[:, None, None, None]).astype(compute_dtype).astype(jnp.float32)
    xq = x.astype(compute_dtype).astype(jnp.float32)
    padding = kernel_size - stride
    lo = padding // 2 if padding % 2 == 0 else padding % 2
    hi = padding - lo
    y = jax.lax.conv_general_dilated(
        xq, wq, window_strides=(stride, stride), padding=((lo, hi), (lo, hi)),
        dimension_numbers=("NCHW", "OIHW", "NCHW"),
        precision=jax.lax.Precision.HIGHEST)
    y = jnp.maximum(y + bias[None, :, None, None], 0.0)
    s = jnp.mean(y, axis=(2, 3))
    z = jnp.maximum(jnp.dot(s, params["se_w1"]) + params["se_b1"], 0.0)
    g = jax.nn.sigmoid(jnp.dot(z, params["se_w2"]) + params["se_b2"])
    return y * g[:, :, None, None]


def make_params(key, in_channel, out_channel, kernel_size, reduction=4):
    ks = jax.random.split(key, 4)
    cr = out_channel // reduction
    return {
        "w_conv": 0.1 * jax.random.normal(
            ks[0], (out_channel, in_channel, kernel_size, kernel_size), jnp.float32),
        # deterministic, non-trivial BN eval-mode stats/affine
        "bn_gamma": 1.0 + 0.1 * jnp.arange(out_channel, dtype=jnp.float32),
        "bn_beta": 0.05 * jnp.arange(out_channel, dtype=jnp.float32),
        "bn_mean": 0.01 * jnp.arange(out_channel, dtype=jnp.float32),
        "bn_var": 1.0 + 0.02 * jnp.arange(out_channel, dtype=jnp.float32),
        "se_w1": 0.2 * jax.random.normal(ks[1], (out_channel, cr), jnp.float32),
        "se_b1": 0.01 * jnp.arange(cr, dtype=jnp.float32),
        "se_w2": 0.2 * jax.random.normal(ks[2], (cr, out_channel), jnp.float32),
        "se_b2": 0.01 * jnp.arange(out_channel, dtype=jnp.float32),
    }


if __name__ == "__main__":
    key = jax.random.PRNGKey(0)
    kx, kp = jax.random.split(key)

    N, Cin, H, W = 2, 4, 16, 16
    Cout, K = 8, 3

    x = jax.random.normal(kx, (N, Cin, H, W), jnp.float32)
    params = make_params(kp, Cin, Cout, K)
    ref = _reference_forward(x, params, K, 1, jnp.bfloat16)
    jax.block_until_ready(ref)

    # Auto band height (single 256-lane band per sample at this size).
    out = conv_block_forward(x, params, kernel_size=K, stride=1)
    jax.block_until_ready(out)
    assert out.shape == (N, Cout, H, W)
    assert bool(jnp.allclose(out, ref, rtol=5e-2, atol=5e-2)), "mismatch vs pure-JAX reference"

    # Multi-band path (exercises the in-kernel band loop + channel-sum accumulation).
    out2 = conv_block_forward(x, params, kernel_size=K, stride=1, block_h=8)
    jax.block_until_ready(out2)
    assert bool(jnp.allclose(out2, ref, rtol=5e-2, atol=5e-2)), "mismatch (banded) vs reference"

    print("KERNEL_OK")
</pallas_src>

<mosaic_0001>
module attributes {stable_mosaic.version = 11 : i64} {
  func.func @_fused_conv_block_kernel(%arg0: i32, %arg1: memref<1x4x18x18xbf16, #tpu.memory_space<vmem>>, %arg2: memref<8x36xbf16, #tpu.memory_space<vmem>>, %arg3: memref<8x1xf32, #tpu.memory_space<vmem>>, %arg4: memref<8x2xf32, #tpu.memory_space<vmem>>, %arg5: memref<1x2xf32, #tpu.memory_space<vmem>>, %arg6: memref<8x2xf32, #tpu.memory_space<vmem>>, %arg7: memref<8x1xf32, #tpu.memory_space<vmem>>, %arg8: memref<1x8x256xf32, #tpu.memory_space<vmem>>) attributes {dimension_semantics = [#tpu.dimension_semantics<parallel>], iteration_bounds = array<i64: 2>, scalar_prefetch = 0 : i64, scratch_operands = 0 : i64, tpu.core_type = #tpu.core_type<tc>, window_params = [{transform_indices = @transform_0, window_bounds = array<i64: 1, 4, 18, 18>}, {pipeline_mode = #tpu.pipeline_mode<synchronous>, transform_indices = @transform_1, window_bounds = array<i64: 8, 36>}, {pipeline_mode = #tpu.pipeline_mode<synchronous>, transform_indices = @transform_2, window_bounds = array<i64: 8, 1>}, {pipeline_mode = #tpu.pipeline_mode<synchronous>, transform_indices = @transform_3, window_bounds = array<i64: 8, 2>}, {pipeline_mode = #tpu.pipeline_mode<synchronous>, transform_indices = @transform_4, window_bounds = array<i64: 1, 2>}, {pipeline_mode = #tpu.pipeline_mode<synchronous>, transform_indices = @transform_5, window_bounds = array<i64: 8, 2>}, {pipeline_mode = #tpu.pipeline_mode<synchronous>, transform_indices = @transform_6, window_bounds = array<i64: 8, 1>}, {transform_indices = @transform_7, window_bounds = array<i64: 1, 8, 256>}]} {
    %c0 = arith.constant 0 : index
    %c0_0 = arith.constant 0 : index
    %c0_1 = arith.constant 0 : index
    %c0_2 = arith.constant 0 : index
    %0 = vector.load %arg1[%c0, %c0_0, %c0_1, %c0_2] : memref<1x4x18x18xbf16, #tpu.memory_space<vmem>>, vector<1x4x18x18xbf16>
    %1 = vector.shape_cast %0 : vector<1x4x18x18xbf16> to vector<4x18x18xbf16>
    %c0_3 = arith.constant 0 : index
    %c0_4 = arith.constant 0 : index
    %2 = vector.load %arg2[%c0_3, %c0_4] : memref<8x36xbf16, #tpu.memory_space<vmem>>, vector<8x36xbf16>
    %c0_5 = arith.constant 0 : index
    %c0_6 = arith.constant 0 : index
    %3 = vector.load %arg3[%c0_5, %c0_6] : memref<8x1xf32, #tpu.memory_space<vmem>>, vector<8x1xf32>
    %cst = arith.constant 0.000000e+00 : f32
    %4 = vector.broadcast %cst : f32 to vector<8x1xf32>
    %5 = vector.extract_strided_slice %1 {offsets = [0, 0, 0], sizes = [4, 16, 16], strides = [1, 1, 1]} : vector<4x18x18xbf16> to vector<4x16x16xbf16>
    %6 = vector.shape_cast %5 : vector<4x16x16xbf16> to vector<4x256xbf16>
    %7 = vector.extract_strided_slice %1 {offsets = [0, 0, 1], sizes = [4, 16, 16], strides = [1, 1, 1]} : vector<4x18x18xbf16> to vector<4x16x16xbf16>
    %8 = vector.shape_cast %7 : vector<4x16x16xbf16> to vector<4x256xbf16>
    %9 = vector.extract_strided_slice %1 {offsets = [0, 0, 2], sizes = [4, 16, 16], strides = [1, 1, 1]} : vector<4x18x18xbf16> to vector<4x16x16xbf16>
    %10 = vector.shape_cast %9 : vector<4x16x16xbf16> to vector<4x256xbf16>
    %11 = vector.extract_strided_slice %1 {offsets = [0, 1, 0], sizes = [4, 16, 16], strides = [1, 1, 1]} : vector<4x18x18xbf16> to vector<4x16x16xbf16>
    %12 = vector.shape_cast %11 : vector<4x16x16xbf16> to vector<4x256xbf16>
    %13 = vector.extract_strided_slice %1 {offsets = [0, 1, 1], sizes = [4, 16, 16], strides = [1, 1, 1]} : vector<4x18x18xbf16> to vector<4x16x16xbf16>
    %14 = vector.shape_cast %13 : vector<4x16x16xbf16> to vector<4x256xbf16>
    %15 = vector.extract_strided_slice %1 {offsets = [0, 1, 2], sizes = [4, 16, 16], strides = [1, 1, 1]} : vector<4x18x18xbf16> to vector<4x16x16xbf16>
    %16 = vector.shape_cast %15 : vector<4x16x16xbf16> to vector<4x256xbf16>
    %17 = vector.extract_strided_slice %1 {offsets = [0, 2, 0], sizes = [4, 16, 16], strides = [1, 1, 1]} : vector<4x18x18xbf16> to vector<4x16x16xbf16>
    %18 = vector.shape_cast %17 : vector<4x16x16xbf16> to vector<4x256xbf16>
    %19 = vector.extract_strided_slice %1 {offsets = [0, 2, 1], sizes = [4, 16, 16], strides = [1, 1, 1]} : vector<4x18x18xbf16> to vector<4x16x16xbf16>
    %20 = vector.shape_cast %19 : vector<4x16x16xbf16> to vector<4x256xbf16>
    %21 = vector.extract_strided_slice %1 {offsets = [0, 2, 2], sizes = [4, 16, 16], strides = [1, 1, 1]} : vector<4x18x18xbf16> to vector<4x16x16xbf16>
    %22 = vector.shape_cast %21 : vector<4x16x16xbf16> to vector<4x256xbf16>
    %23 = tpu.concatenate %6, %8, %10, %12, %14, %16, %18, %20, %22 in 0 : vector<4x256xbf16>, vector<4x256xbf16>, vector<4x256xbf16>, vector<4x256xbf16>, vector<4x256xbf16>, vector<4x256xbf16>, vector<4x256xbf16>, vector<4x256xbf16>, vector<4x256xbf16> -> vector<36x256xbf16>
    %cst_7 = arith.constant dense<0.000000e+00> : vector<8x256xf32>
    %24 = tpu.matmul %2, %23, %cst_7 {dimension_numbers = #tpu.dot_dimension_numbers<[1], [0], [0], [1], [0, 0, 1, 1], [], []>} : vector<8x36xbf16>, vector<36x256xbf16>, vector<8x256xf32> -> vector<8x256xf32>
    %25 = vector.broadcast %3 : vector<8x1xf32> to vector<8x256xf32>
    %26 = arith.addf %24, %25 : vector<8x256xf32>
    %cst_8 = arith.constant 0.000000e+00 : f32
    %27 = vector.broadcast %cst_8 : f32 to vector<8x256xf32>
    %28 = arith.maximumf %26, %27 : vector<8x256xf32>
    %c0_9 = arith.constant 0 : index
    %c0_10 = arith.constant 0 : index
    %c0_11 = arith.constant 0 : index
    %29 = vector.load %arg8[%c0_9, %c0_10, %c0_11] : memref<1x8x256xf32, #tpu.memory_space<vmem>>, vector<1x8x256xf32>
    %30 = vector.shape_cast %29 : vector<1x8x256xf32> to vector<8x256xf32>
    %31 = vector.shape_cast %28 : vector<8x256xf32> to vector<1x8x256xf32>
    tpu.vector_store %arg8[%c0_9, %c0_10, %c0_11], %31 {strides = array<i32>} : memref<1x8x256xf32, #tpu.memory_space<vmem>>, vector<1x8x256xf32>,
    %cst_12 = arith.constant dense<0.000000e+00> : vector<8xf32>
    %32 = vector.multi_reduction <add>, %28, %cst_12 [1] : vector<8x256xf32> to vector<8xf32>
    %33 = vector.shape_cast %32 : vector<8xf32> to vector<8x1xf32>
    %34 = arith.addf %4, %33 : vector<8x1xf32>
    %cst_13 = arith.constant 3.906250e-03 : f32
    %35 = vector.broadcast %cst_13 : f32 to vector<8x1xf32>
    %36 = arith.mulf %34, %35 : vector<8x1xf32>
    %c0_14 = arith.constant 0 : index
    %c0_15 = arith.constant 0 : index
    %37 = vector.load %arg4[%c0_14, %c0_15] : memref<8x2xf32, #tpu.memory_space<vmem>>, vector<8x2xf32>
    %38 = vector.broadcast %36 : vector<8x1xf32> to vector<8x2xf32>
    %39 = arith.mulf %38, %37 : vector<8x2xf32>
    %cst_16 = arith.constant dense<0.000000e+00> : vector<2xf32>
    %40 = vector.multi_reduction <add>, %39, %cst_16 [0] : vector<8x2xf32> to vector<2xf32>
    %41 = vector.shape_cast %40 : vector<2xf32> to vector<1x2xf32>
    %c0_17 = arith.constant 0 : index
    %c0_18 = arith.constant 0 : index
    %42 = vector.load %arg5[%c0_17, %c0_18] : memref<1x2xf32, #tpu.memory_space<vmem>>, vector<1x2xf32>
    %43 = arith.addf %41, %42 : vector<1x2xf32>
    %cst_19 = arith.constant 0.000000e+00 : f32
    %44 = vector.broadcast %cst_19 : f32 to vector<1x2xf32>
    %45 = arith.maximumf %43, %44 : vector<1x2xf32>
    %c0_20 = arith.constant 0 : index
    %c0_21 = arith.constant 0 : index
    %46 = vector.load %arg6[%c0_20, %c0_21] : memref<8x2xf32, #tpu.memory_space<vmem>>, vector<8x2xf32>
    %47 = vector.broadcast %45 : vector<1x2xf32> to vector<8x2xf32>
    %48 = arith.mulf %46, %47 : vector<8x2xf32>
    %cst_22 = arith.constant dense<0.000000e+00> : vector<8xf32>
    %49 = vector.multi_reduction <add>, %48, %cst_22 [1] : vector<8x2xf32> to vector<8xf32>
    %50 = vector.shape_cast %49 : vector<8xf32> to vector<8x1xf32>
    %c0_23 = arith.constant 0 : index
    %c0_24 = arith.constant 0 : index
    %51 = vector.load %arg7[%c0_23, %c0_24] : memref<8x1xf32, #tpu.memory_space<vmem>>, vector<8x1xf32>
    %52 = arith.addf %50, %51 : vector<8x1xf32>
    %cst_25 = arith.constant 0.000000e+00 : f32
    %53 = vector.broadcast %cst_25 : f32 to vector<8x1xf32>
    %54 = arith.subf %53, %52 : vector<8x1xf32>
    %55 = math.exp %54 : vector<8x1xf32>
    %cst_26 = arith.constant 1.000000e+00 : f32
    %56 = vector.broadcast %cst_26 : f32 to vector<8x1xf32>
    %57 = arith.addf %56, %55 : vector<8x1xf32>
    %cst_27 = arith.constant 1.000000e+00 : f32
    %58 = vector.broadcast %cst_27 : f32 to vector<8x1xf32>
    %59 = arith.divf %58, %57 : vector<8x1xf32>
    %c0_28 = arith.constant 0 : index
    %c0_29 = arith.constant 0 : index
    %c0_30 = arith.constant 0 : index
    %60 = vector.load %arg8[%c0_28, %c0_29, %c0_30] : memref<1x8x256xf32, #tpu.memory_space<vmem>>, vector<1x8x256xf32>
    %61 = vector.shape_cast %60 : vector<1x8x256xf32> to vector<8x256xf32>
    %62 = vector.broadcast %59 : vector<8x1xf32> to vector<8x256xf32>
    %63 = arith.mulf %61, %62 : vector<8x256xf32>
    %c0_31 = arith.constant 0 : index
    %c0_32 = arith.constant 0 : index
    %c0_33 = arith.constant 0 : index
    %64 = vector.load %arg8[%c0_31, %c0_32, %c0_33] : memref<1x8x256xf32, #tpu.memory_space<vmem>>, vector<1x8x256xf32>
    %65 = vector.shape_cast %64 : vector<1x8x256xf32> to vector<8x256xf32>
    %66 = vector.shape_cast %63 : vector<8x256xf32> to vector<1x8x256xf32>
    tpu.vector_store %arg8[%c0_31, %c0_32, %c0_33], %66 {strides = array<i32>} : memref<1x8x256xf32, #tpu.memory_space<vmem>>, vector<1x8x256xf32>,
    return
  }
  func.func @transform_0(%arg0: i32) -> (i32, i32, i32, i32) {
    %c0_i32 = arith.constant 0 : i32
    %c0_i32_0 = arith.constant 0 : i32
    %c0_i32_1 = arith.constant 0 : i32
    %c0_i32_2 = arith.constant 0 : i32
    return %arg0, %c0_i32, %c0_i32_0, %c0_i32_1 : i32, i32, i32, i32
  }
  func.func @transform_1(%arg0: i32) -> (i32, i32) {
    %c0_i32 = arith.constant 0 : i32
    %c0_i32_0 = arith.constant 0 : i32
    %c0_i32_1 = arith.constant 0 : i32
    return %c0_i32, %c0_i32_0 : i32, i32
  }
  func.func @transform_2(%arg0: i32) -> (i32, i32) {
    %c0_i32 = arith.constant 0 : i32
    %c0_i32_0 = arith.constant 0 : i32
    %c0_i32_1 = arith.constant 0 : i32
    return %c0_i32, %c0_i32_0 : i32, i32
  }
  func.func @transform_3(%arg0: i32) -> (i32, i32) {
    %c0_i32 = arith.constant 0 : i32
    %c0_i32_0 = arith.constant 0 : i32
    %c0_i32_1 = arith.constant 0 : i32
    return %c0_i32, %c0_i32_0 : i32, i32
  }
  func.func @transform_4(%arg0: i32) -> (i32, i32) {
    %c0_i32 = arith.constant 0 : i32
    %c0_i32_0 = arith.constant 0 : i32
    %c0_i32_1 = arith.constant 0 : i32
    return %c0_i32, %c0_i32_0 : i32, i32
  }
  func.func @transform_5(%arg0: i32) -> (i32, i32) {
    %c0_i32 = arith.constant 0 : i32
    %c0_i32_0 = arith.constant 0 : i32
    %c0_i32_1 = arith.constant 0 : i32
    return %c0_i32, %c0_i32_0 : i32, i32
  }
  func.func @transform_6(%arg0: i32) -> (i32, i32) {
    %c0_i32 = arith.constant 0 : i32
    %c0_i32_0 = arith.constant 0 : i32
    %c0_i32_1 = arith.constant 0 : i32
    return %c0_i32, %c0_i32_0 : i32, i32
  }
  func.func @transform_7(%arg0: i32) -> (i32, i32, i32) {
    %c0_i32 = arith.constant 0 : i32
    %c0_i32_0 = arith.constant 0 : i32
    %c0_i32_1 = arith.constant 0 : i32
    return %arg0, %c0_i32, %c0_i32_0 : i32, i32, i32
  }
}

</mosaic_0001>

<llo_original>
// kernel: tpu_custom_call.1
$region0: #{tpu_custom_call.1}
  #allocation0 [shape = 'u32[]', space=smem, size = 0x4, offset = 0x4, fixed_abs, tag = 'smem constant byte address 0x4 - core index']
  #allocation1 [shape = 'u32[72,128]{1,0:T(1,128)}', space=vmem, size = 0x9000, scoped, tag = 'internal scratch']
  %s0 = inlined_call_operand.vmem [shape: bf16[2,4,18,18], index: 0, kind: input, shape index: {}]
  %s1 = inlined_call_operand.vmem [shape: bf16[8,36], index: 1, kind: input, shape index: {}]
  %s2 = inlined_call_operand.vmem [shape: f32[8,1], index: 2, kind: input, shape index: {}]
  %s3 = inlined_call_operand.vmem [shape: f32[8,2], index: 3, kind: input, shape index: {}]
  %s4 = inlined_call_operand.vmem [shape: f32[1,2], index: 4, kind: input, shape index: {}]
  %s5 = inlined_call_operand.vmem [shape: f32[8,2], index: 5, kind: input, shape index: {}]
  %s6 = inlined_call_operand.vmem [shape: f32[8,1], index: 6, kind: input, shape index: {}]
  %s7 = inlined_call_operand.hbm [shape: f32[2,8,256], index: 7, kind: output, shape index: {}]
  %s8 = sld [smem:[#allocation0]]
  $region61: #{tpu_custom_call.1} parent=0
    _
  %s10 = ssub.s32 1, %s8
  %s11 = scalar_select 0, %s10, %s8
  $region1: #{tpu_custom_call.1} parent=0
    #allocation2 [shape = 'u8[16384]{0}', space=vmem, size = 0x4000, scoped, tag = 'output window, operand 0']
    #allocation3 [shape = 's32[2]{0}', space=sflag, size = 0x8, scoped, tag = 'scoped memory for tpu_custom_call.1']
    %12 = vsyncpa [#allocation3], 0
    %s13 = scalar_lea.sflag [#allocation3], 1
    %14 = vsyncpa %s13, 0
    loop: start=0, step=1, limit=4
    $region2: #{tpu_custom_call.1} parent=1 // loop_pre_header
      _
    $region3: #{tpu_custom_call.1} parent=1 // loop_header
      %s16 = sphi 0, %s20
      %p17 = scmp.ge.s32.totalorder %s16, 4
      %s26 = sphi 0, %s28
      %s29 = sphi 0, %s26
      %s30 = sphi 0, %s29
      %s46 = sphi 0, %s30
      %s50 = sphi 0, %s50
      %s52 = sphi 0, %s50
      %s53 = sphi 0, %s52
      %s67 = sphi 0, %s53
      %s71 = sphi 0, %s71
      %s73 = sphi 0, %s71
      %s74 = sphi 0, %s73
      %s88 = sphi 0, %s74
      %s92 = sphi 0, %s92
      %s94 = sphi 0, %s92
      %s95 = sphi 0, %s94
      %s109 = sphi 0, %s95
      %s113 = sphi 0, %s113
      %s115 = sphi 0, %s113
      %s116 = sphi 0, %s115
      %s130 = sphi 0, %s116
      %s134 = sphi 0, %s134
      %s136 = sphi 0, %s134
      %s137 = sphi 0, %s136
      %s151 = sphi 0, %s137
      %s155 = sphi 0, %s155
      %s157 = sphi 0, %s155
      %s158 = sphi 0, %s157
      %s172 = sphi 0, %s158
      %s178 = sphi 0, %s180
      %s181 = sphi 0, %s178
      %s182 = sphi 0, %s181
      %s198 = sphi 0, %s182
    $region4: #{tpu_custom_call.1} parent=1 // loop_header_branch
      %19 = sbr.rel (%p17) target = $region8
    $region5: #{tpu_custom_call.1} parent=1 // loop_body
      %s21 = ssub.s32 %s16, 1
      %s22 = ssub.s32 %s16, 2
      %s23 = sadd.s32 %s16, 1
      %s24 = ssub.s32 %s16, %s23
      %p25 = scmp.eq.s32.totalorder %s24, 0
      %s27 = sadd.s32 %s26, 1
      %s28 = scalar_select %p25, %s26, %s27
      %p31 = pneg %p25
      %p32 = scmp.eq.s32.totalorder %s16, 1
      %p33 = por %p31, %p32
      %p34 = scmp.ne.s32.totalorder %s26, %s29
      %p35 = scmp.eq.s32.totalorder %s16, 0
      %p36 = por %p34, %p35
      %p37 = scmp.ne.s32.totalorder %s26, %s29
      %p38 = scmp.eq.s32.totalorder %s21, 1
      %p39 = por %p37, %p38
      %p40 = scmp.ne.s32.totalorder %s29, %s30
      %p41 = scmp.eq.s32.totalorder %s21, 0
      %p42 = por %p40, %p41
      %p43 = scmp.ne.s32.totalorder %s29, %s30
      %p44 = scmp.eq.s32.totalorder %s22, 1
      %p45 = por %p43, %p44
      %p47 = scmp.ne.s32.totalorder %s30, %s46
      %p48 = scmp.eq.s32.totalorder %s22, 0
      %p49 = por %p47, %p48
      %s51 = sadd.s32 %s50, 1
      %p54 = scmp.eq.s32.totalorder %s16, 1
      %p55 = scmp.ne.s32.totalorder %s50, %s52
      %p56 = scmp.eq.s32.totalorder %s16, 0
      %p57 = por %p55, %p56
      %p58 = scmp.ne.s32.totalorder %s50, %s52
      %p59 = scmp.eq.s32.totalorder %s21, 1
      %p60 = por %p58, %p59
      %p61 = scmp.ne.s32.totalorder %s52, %s53
      %p62 = scmp.eq.s32.totalorder %s21, 0
      %p63 = por %p61, %p62
      %p64 = scmp.ne.s32.totalorder %s52, %s53
      %p65 = scmp.eq.s32.totalorder %s22, 1
      %p66 = por %p64, %p65
      %p68 = scmp.ne.s32.totalorder %s53, %s67
      %p69 = scmp.eq.s32.totalorder %s22, 0
      %p70 = por %p68, %p69
      %s72 = sadd.s32 %s71, 1
      %p75 = scmp.eq.s32.totalorder %s16, 1
      %p76 = scmp.ne.s32.totalorder %s71, %s73
      %p77 = scmp.eq.s32.totalorder %s16, 0
      %p78 = por %p76, %p77
      %p79 = scmp.ne.s32.totalorder %s71, %s73
      %p80 = scmp.eq.s32.totalorder %s21, 1
      %p81 = por %p79, %p80
      %p82 = scmp.ne.s32.totalorder %s73, %s74
      %p83 = scmp.eq.s32.totalorder %s21, 0
      %p84 = por %p82, %p83
      %p85 = scmp.ne.s32.totalorder %s73, %s74
      %p86 = scmp.eq.s32.totalorder %s22, 1
      %p87 = por %p85, %p86
      %p89 = scmp.ne.s32.totalorder %s74, %s88
      %p90 = scmp.eq.s32.totalorder %s22, 0
      %p91 = por %p89, %p90
      %s93 = sadd.s32 %s92, 1
      %p96 = scmp.eq.s32.totalorder %s16, 1
      %p97 = scmp.ne.s32.totalorder %s92, %s94
      %p98 = scmp.eq.s32.totalorder %s16, 0
      %p99 = por %p97, %p98
      %p100 = scmp.ne.s32.totalorder %s92, %s94
      %p101 = scmp.eq.s32.totalorder %s21, 1
      %p102 = por %p100, %p101
      %p103 = scmp.ne.s32.totalorder %s94, %s95
      %p104 = scmp.eq.s32.totalorder %s21, 0
      %p105 = por %p103, %p104
      %p106 = scmp.ne.s32.totalorder %s94, %s95
      %p107 = scmp.eq.s32.totalorder %s22, 1
      %p108 = por %p106, %p107
      %p110 = scmp.ne.s32.totalorder %s95, %s109
      %p111 = scmp.eq.s32.totalorder %s22, 0
      %p112 = por %p110, %p111
      %s114 = sadd.s32 %s113, 1
      %p117 = scmp.eq.s32.totalorder %s16, 1
      %p118 = scmp.ne.s32.totalorder %s113, %s115
      %p119 = scmp.eq.s32.totalorder %s16, 0
      %p120 = por %p118, %p119
      %p121 = scmp.ne.s32.totalorder %s113, %s115
      %p122 = scmp.eq.s32.totalorder %s21, 1
      %p123 = por %p121, %p122
      %p124 = scmp.ne.s32.totalorder %s115, %s116
      %p125 = scmp.eq.s32.totalorder %s21, 0
      %p126 = por %p124, %p125
      %p127 = scmp.ne.s32.totalorder %s115, %s116
      %p128 = scmp.eq.s32.totalorder %s22, 1
      %p129 = por %p127, %p128
      %p131 = scmp.ne.s32.totalorder %s116, %s130
      %p132 = scmp.eq.s32.totalorder %s22, 0
      %p133 = por %p131, %p132
      %s135 = sadd.s32 %s134, 1
      %p138 = scmp.eq.s32.totalorder %s16, 1
      %p139 = scmp.ne.s32.totalorder %s134, %s136
      %p140 = scmp.eq.s32.totalorder %s16, 0
      %p141 = por %p139, %p140
      %p142 = scmp.ne.s32.totalorder %s134, %s136
      %p143 = scmp.eq.s32.totalorder %s21, 1
      %p144 = por %p142, %p143
      %p145 = scmp.ne.s32.totalorder %s136, %s137
      %p146 = scmp.eq.s32.totalorder %s21, 0
      %p147 = por %p145, %p146
      %p148 = scmp.ne.s32.totalorder %s136, %s137
      %p149 = scmp.eq.s32.totalorder %s22, 1
      %p150 = por %p148, %p149
      %p152 = scmp.ne.s32.totalorder %s137, %s151
      %p153 = scmp.eq.s32.totalorder %s22, 0
      %p154 = por %p152, %p153
      %s156 = sadd.s32 %s155, 1
      %p159 = scmp.eq.s32.totalorder %s16, 1
      %p160 = scmp.ne.s32.totalorder %s155, %s157
      %p161 = scmp.eq.s32.totalorder %s16, 0
      %p162 = por %p160, %p161
      %p163 = scmp.ne.s32.totalorder %s155, %s157
      %p164 = scmp.eq.s32.totalorder %s21, 1
      %p165 = por %p163, %p164
      %p166 = scmp.ne.s32.totalorder %s157, %s158
      %p167 = scmp.eq.s32.totalorder %s21, 0
      %p168 = por %p166, %p167
      %p169 = scmp.ne.s32.totalorder %s157, %s158
      %p170 = scmp.eq.s32.totalorder %s22, 1
      %p171 = por %p169, %p170
      %p173 = scmp.ne.s32.totalorder %s158, %s172
      %p174 = scmp.eq.s32.totalorder %s22, 0
      %p175 = por %p173, %p174
      %s176 = ssub.s32 %s16, %s23
      %p177 = scmp.eq.s32.totalorder %s176, 0
      %s179 = sadd.s32 %s178, 1
      %s180 = scalar_select %p177, %s178, %s179
      %p183 = pneg %p177
      %p184 = scmp.eq.s32.totalorder %s16, 1
      %p185 = por %p183, %p184
      %p186 = scmp.ne.s32.totalorder %s178, %s181
      %p187 = scmp.eq.s32.totalorder %s16, 0
      %p188 = por %p186, %p187
      %p189 = scmp.ne.s32.totalorder %s178, %s181
      %p190 = scmp.eq.s32.totalorder %s21, 1
      %p191 = por %p189, %p190
      %p192 = scmp.ne.s32.totalorder %s181, %s182
      %p193 = scmp.eq.s32.totalorder %s21, 0
      %p194 = por %p192, %p193
      %p195 = scmp.ne.s32.totalorder %s181, %s182
      %p196 = scmp.eq.s32.totalorder %s22, 1
      %p197 = por %p195, %p196
      %p199 = scmp.ne.s32.totalorder %s182, %s198
      %p200 = scmp.eq.s32.totalorder %s22, 0
      %p201 = por %p199, %p200
      %p202 = scmp.le.s32.totalorder 1, %s16
      %p203 = scmp.lt.s32.totalorder %s16, 3
      %p204 = pnand %p202, %p203
      %p205 = pneg %p204
      // Predicated region
      $region9: #{tpu_custom_call.1} parent=5 // pred_check
        _
      $region10: #{tpu_custom_call.1} parent=5 // pred_check_branch
        %207 = sbr.rel (%p204) target = $region12
      $region11: #{tpu_custom_call.1} parent=5 // pred_region
        %s208 = ssub.s32 %s16, 1
        // Predicated region
        $region13: #{tpu_custom_call.1} parent=11 // pred_check
          %p209 = pneg %p63
        $region14: #{tpu_custom_call.1} parent=11 // pred_check_branch
          %211 = sbr.rel (%p209) target = $region16
        $region15: #{tpu_custom_call.1} parent=11 // pred_region
          _
        $region16: #{tpu_custom_call.1} parent=11 // pred_fallthru
          _
        // Predicated region
        $region17: #{tpu_custom_call.1} parent=11 // pred_check
          %p212 = pneg %p84
        $region18: #{tpu_custom_call.1} parent=11 // pred_check_branch
          %214 = sbr.rel (%p212) target = $region20
        $region19: #{tpu_custom_call.1} parent=11 // pred_region
          _
        $region20: #{tpu_custom_call.1} parent=11 // pred_fallthru
          _
        // Predicated region
        $region21: #{tpu_custom_call.1} parent=11 // pred_check
          %p215 = pneg %p105
        $region22: #{tpu_custom_call.1} parent=11 // pred_check_branch
          %217 = sbr.rel (%p215) target = $region24
        $region23: #{tpu_custom_call.1} parent=11 // pred_region
          _
        $region24: #{tpu_custom_call.1} parent=11 // pred_fallthru
          _
        // Predicated region
        $region25: #{tpu_custom_call.1} parent=11 // pred_check
          %p218 = pneg %p126
        $region26: #{tpu_custom_call.1} parent=11 // pred_check_branch
          %220 = sbr.rel (%p218) target = $region28
        $region27: #{tpu_custom_call.1} parent=11 // pred_region
          _
        $region28: #{tpu_custom_call.1} parent=11 // pred_fallthru
          _
        // Predicated region
        $region29: #{tpu_custom_call.1} parent=11 // pred_check
          %p221 = pneg %p147
        $region30: #{tpu_custom_call.1} parent=11 // pred_check_branch
          %223 = sbr.rel (%p221) target = $region32
        $region31: #{tpu_custom_call.1} parent=11 // pred_region
          _
        $region32: #{tpu_custom_call.1} parent=11 // pred_fallthru
          _
        // Predicated region
        $region33: #{tpu_custom_call.1} parent=11 // pred_check
          %p224 = pneg %p168
        $region34: #{tpu_custom_call.1} parent=11 // pred_check_branch
          %226 = sbr.rel (%p224) target = $region36
        $region35: #{tpu_custom_call.1} parent=11 // pred_region
          _
        $region36: #{tpu_custom_call.1} parent=11 // pred_fallthru
          _
      $region12: #{tpu_custom_call.1} parent=5 // pred_fallthru
        _
      %p227 = scmp.lt.s32.totalorder %s16, 2
      // Predicated region
      $region37: #{tpu_custom_call.1} parent=5 // pred_check
        %p228 = pneg %p227
      $region38: #{tpu_custom_call.1} parent=5 // pred_check_branch
        %230 = sbr.rel (%p228) target = $region40
      $region39: #{tpu_custom_call.1} parent=5 // pred_region
        // Predicated region
        $region41: #{tpu_custom_call.1} parent=39 // pred_check
          %p231 = pneg %p36
        $region42: #{tpu_custom_call.1} parent=39 // pred_check_branch
          %233 = sbr.rel (%p231) target = $region44
        $region43: #{tpu_custom_call.1} parent=39 // pred_region
          %p234 = scmp.lt.s32.totalorder %s16, 1
          %s235 = scalar_select %p234, %s16, 1
          %s236 = smul.addr %s235, 12
          %s237 = smul.addr %s236, 4
          %s238 = scalar_lea.vmem %s0, %s237
        $region44: #{tpu_custom_call.1} parent=39 // pred_fallthru
          _
      $region40: #{tpu_custom_call.1} parent=5 // pred_fallthru
        _
      %p239 = scmp.le.s32.totalorder 1, %s16
      %p240 = scmp.lt.s32.totalorder %s16, 3
      %p241 = pnand %p239, %p240
      %p242 = pneg %p241
      // Predicated region
      $region45: #{tpu_custom_call.1} parent=5 // pred_check
        _
      $region46: #{tpu_custom_call.1} parent=5 // pred_check_branch
        %244 = sbr.rel (%p241) target = $region48
      $region47: #{tpu_custom_call.1} parent=5 // pred_region
        %s245 = ssub.s32 %s16, 1
        %p246 = scmp.lt.s32.totalorder %s21, 1
        %s247 = scalar_select %p246, %s21, 1
        %s248 = smul.addr %s247, 12
        %s249 = smul.addr %s248, 4
        %s250 = scalar_lea.vmem %s0, %s249
        %p251 = pneg %p42
        %p252 = pneg %p39
        %p253 = pneg %p63
        %p254 = pneg %p60
        %p255 = pneg %p84
        %p256 = pneg %p81
        %p257 = pneg %p105
        %p258 = pneg %p102
        %p259 = pneg %p126
        %p260 = pneg %p123
        %p261 = pneg %p147
        %p262 = pneg %p144
        %p263 = pneg %p168
        %p264 = pneg %p165
        %p265 = pneg %p194
        %p266 = pneg %p191
        %s267 = sand.u32 %s181, 1
        %s268 = scalar_lea.sflag [#allocation3], %s267
        %s269 = sand.u32 %s181, 1
        %s270 = smul.addr %s269, 16
        %s271 = scalar_lea.vmem [#allocation2], %s270
        %p272 = scmp.lt.s32.totalorder %s21, 1
        %s273 = scalar_select %p272, %s21, 1
        %s274 = smul.addr %s273, 12
        %s275 = smul.addr %s274, 4
        %s276 = scalar_lea.vmem %s0, %s275
        %v278 = vld [vmem:[%s276] sm:$0xf]
        %v279 = vld [vmem:[%s276 + $0x4] sm:$0xf]
        %v280 = vld [vmem:[%s276 + $0x8] sm:$0x1]
        %v281 = vld [vmem:[%s276 + $0xc] sm:$0xf]
        %v282 = vld [vmem:[%s276 + $0x10] sm:$0xf]
        %v283 = vld [vmem:[%s276 + $0x14] sm:$0x1]
        %v284 = vld [vmem:[%s276 + $0x18] sm:$0xf]
        %v285 = vld [vmem:[%s276 + $0x1c] sm:$0xf]
        %v286 = vld [vmem:[%s276 + $0x20] sm:$0x1]
        %v287 = vld [vmem:[%s276 + $0x24] sm:$0xf]
        %v288 = vld [vmem:[%s276 + $0x28] sm:$0xf]
        %v289 = vld [vmem:[%s276 + $0x2c] sm:$0x1]
        %v290 = vld [vmem:[%s1] sm:$0xf]
        %v291 = vld [vmem:[%s2] sm:$0xff]
        %v294 = vpack.i.b16 %v281, %v278
        %v295 = vshrl.u32 %v278, 16
        %v296 = vshrl.u32 %v281, 16
        %v297 = vpack.i.b16 %v296, %v295
        %v300 = vpack.i.b16 %v287, %v284
        %v301 = vshrl.u32 %v284, 16
        %v302 = vshrl.u32 %v287, 16
        %v303 = vpack.i.b16 %v302, %v301
        %v306 = vpack.i.b16 %v282, %v279
        %v307 = vshrl.u32 %v279, 16
        %v308 = vshrl.u32 %v282, 16
        %v309 = vpack.i.b16 %v308, %v307
        %v312 = vpack.i.b16 %v288, %v285
        %v313 = vshrl.u32 %v285, 16
        %v314 = vshrl.u32 %v288, 16
        %v315 = vpack.i.b16 %v314, %v313
        %v318 = vunpack.c.l.s4 1983009808
        %v319 = vunpack.c.0.s8 %v318
        %v320 = vperm.slane %v294, %v319
        %v323 = vunpack.c.l.s4 1983009808
        %v324 = vunpack.c.0.s8 %v323
        %v325 = vperm.slane %v300, %v324
        %v326 = vrot.slane %v325, 4
        %vm327 = vcmask 1047556
        %v328 = vsel %vm327, %v326, %v320
        %v329 = vrot.slane %v320, 4
        %v330 = vsel %vm327, %v325, %v329
        %v332 = vunpack.c.l.s4 1934713408
        %v333 = vunpack.c.0.s8 %v332
        %v334 = vperm.slane %v328, %v333
        %v336 = vunpack.c.l.s4 1934713408
        %v337 = vunpack.c.0.s8 %v336
        %v338 = vperm.slane %v330, %v337
        %v339 = vrot.slane %v334, 4
        %v340 = vsel %vm327, 0, %v339
        %v341 = vrot.slane %v338, 4
        %v342 = vsel %vm327, 0, %v341
        %v345 = vunpack.c.l.s4 1983009808
        %v346 = vunpack.c.0.s8 %v345
        %v347 = vperm.slane %v297, %v346
        %v350 = vunpack.c.l.s4 1983009808
        %v351 = vunpack.c.0.s8 %v350
        %v352 = vperm.slane %v303, %v351
        %v353 = vrot.slane %v352, 4
        %v354 = vsel %vm327, %v353, %v347
        %v355 = vrot.slane %v347, 4
        %v356 = vsel %vm327, %v352, %v355
        %v358 = vunpack.c.l.s4 1934713408
        %v359 = vunpack.c.0.s8 %v358
        %v360 = vperm.slane %v354, %v359
        %v362 = vunpack.c.l.s4 1934713408
        %v363 = vunpack.c.0.s8 %v362
        %v364 = vperm.slane %v356, %v363
        %v365 = vrot.slane %v360, 4
        %v366 = vsel %vm327, 0, %v365
        %v367 = vrot.slane %v364, 4
        %v368 = vsel %vm327, 0, %v367
        %v371 = vunpack.c.l.s4 1983009808
        %v372 = vunpack.c.0.s8 %v371
        %v373 = vperm.slane %v306, %v372
        %v376 = vunpack.c.l.s4 1983009808
        %v377 = vunpack.c.0.s8 %v376
        %v378 = vperm.slane %v312, %v377
        %v379 = vrot.slane %v378, 4
        %v380 = vsel %vm327, %v379, %v373
        %v381 = vrot.slane %v373, 4
        %v382 = vsel %vm327, %v378, %v381
        %v384 = vunpack.c.l.s4 1934713408
        %v385 = vunpack.c.0.s8 %v384
        %v386 = vperm.slane %v380, %v385
        %v388 = vunpack.c.l.s4 1934713408
        %v389 = vunpack.c.0.s8 %v388
        %v390 = vperm.slane %v382, %v389
        %v391 = vrot.slane %v386, 4
        %v392 = vsel %vm327, 0, %v391
        %v393 = vrot.slane %v390, 4
        %v394 = vsel %vm327, 0, %v393
        %v397 = vunpack.c.l.s4 1983009808
        %v398 = vunpack.c.0.s8 %v397
        %v399 = vperm.slane %v309, %v398
        %v402 = vunpack.c.l.s4 1983009808
        %v403 = vunpack.c.0.s8 %v402
        %v404 = vperm.slane %v315, %v403
        %v405 = vrot.slane %v404, 4
        %v406 = vsel %vm327, %v405, %v399
        %v407 = vrot.slane %v399, 4
        %v408 = vsel %vm327, %v404, %v407
        %v410 = vunpack.c.l.s4 1934713408
        %v411 = vunpack.c.0.s8 %v410
        %v412 = vperm.slane %v406, %v411
        %v414 = vunpack.c.l.s4 1934713408
        %v415 = vunpack.c.0.s8 %v414
        %v416 = vperm.slane %v408, %v415
        %v417 = vrot.slane %v412, 4
        %v418 = vsel %vm327, 0, %v417
        %v419 = vrot.slane %v416, 4
        %v420 = vsel %vm327, 0, %v419
        %v422 = vunpack.c.l.b16 %v360
        %v423 = vpack.c.b16 %v422, %v422
        %424 = vrot.lane.b32.xlu0 %v423, 16
        %v425 = vpop.permute.xlu0 %424
        %v427 = vunpack.c.l.b16 %v340
        %v428 = vpack.c.b16 %v427, %v427
        %429 = vrot.lane.b32.xlu0 %v428, 32
        %v430 = vpop.permute.xlu0 %429
        %v432 = vunpack.c.l.b16 %v366
        %v433 = vpack.c.b16 %v432, %v432
        %434 = vrot.lane.b32.xlu0 %v433, 48
        %v435 = vpop.permute.xlu0 %434
        %v437 = vunpack.c.l.b16 %v338
        %v438 = vpack.c.b16 %v437, %v437
        %439 = vrot.lane.b32.xlu0 %v438, 64
        %v440 = vpop.permute.xlu0 %439
        %v442 = vunpack.c.l.b16 %v364
        %v443 = vpack.c.b16 %v442, %v442
        %444 = vrot.lane.b32.xlu0 %v443, 80
        %v445 = vpop.permute.xlu0 %444
        %v447 = vunpack.c.l.b16 %v342
        %v448 = vpack.c.b16 %v447, %v447
        %449 = vrot.lane.b32.xlu0 %v448, 96
        %v450 = vpop.permute.xlu0 %449
        %v452 = vunpack.c.l.b16 %v368
        %v453 = vpack.c.b16 %v452, %v452
        %454 = vrot.lane.b32.xlu0 %v453, 112
        %v455 = vpop.permute.xlu0 %454
        %v457 = vunpack.c.l.b16 %v412
        %v458 = vpack.c.b16 %v457, %v457
        %459 = vrot.lane.b32.xlu0 %v458, 16
        %v460 = vpop.permute.xlu0 %459
        %v462 = vunpack.c.l.b16 %v392
        %v463 = vpack.c.b16 %v462, %v462
        %464 = vrot.lane.b32.xlu0 %v463, 32
        %v465 = vpop.permute.xlu0 %464
        %v467 = vunpack.c.l.b16 %v418
        %v468 = vpack.c.b16 %v467, %v467
        %469 = vrot.lane.b32.xlu0 %v468, 48
        %v470 = vpop.permute.xlu0 %469
        %v472 = vunpack.c.l.b16 %v390
        %v473 = vpack.c.b16 %v472, %v472
        %474 = vrot.lane.b32.xlu0 %v473, 64
        %v475 = vpop.permute.xlu0 %474
        %v477 = vunpack.c.l.b16 %v416
        %v478 = vpack.c.b16 %v477, %v477
        %479 = vrot.lane.b32.xlu0 %v478, 80
        %v480 = vpop.permute.xlu0 %479
        %v482 = vunpack.c.l.b16 %v394
        %v483 = vpack.c.b16 %v482, %v482
        %484 = vrot.lane.b32.xlu0 %v483, 96
        %v485 = vpop.permute.xlu0 %484
        %v487 = vunpack.c.l.b16 %v420
        %v488 = vpack.c.b16 %v487, %v487
        %489 = vrot.lane.b32.xlu0 %v488, 112
        %v490 = vpop.permute.xlu0 %489
        %vm491 = vcmask 130048
        %v494 = vsel %vm491, %v334, %v425
        %vm495 = vcmask 261120
        %v497 = vsel %vm495, %v494, %v430
        %vm498 = vcmask 392192
        %v500 = vsel %vm498, %v497, %v435
        %vm501 = vcmask 523264
        %v503 = vsel %vm501, %v500, %v440
        %vm504 = vcmask 654336
        %v506 = vsel %vm504, %v503, %v445
        %vm507 = vcmask 785408
        %v509 = vsel %vm507, %v506, %v450
        %vm510 = vcmask 916480
        %v512 = vsel %vm510, %v509, %v455
        %v515 = vsel %vm491, %v386, %v460
        %v517 = vsel %vm495, %v515, %v465
        %v519 = vsel %vm498, %v517, %v470
        %v521 = vsel %vm501, %v519, %v475
        %v523 = vsel %vm504, %v521, %v480
        %v525 = vsel %vm507, %v523, %v485
        %v527 = vsel %vm510, %v525, %v490
        %536 = vrot.lane.b32.xlu0 %v278, 127
        %v537 = vpop.permute.xlu0 %536
        %538 = vrot.lane.b32.xlu0 %v279, 127
        %v539 = vpop.permute.xlu0 %538
        %540 = vrot.lane.b32.xlu0 %v281, 127
        %v541 = vpop.permute.xlu0 %540
        %542 = vrot.lane.b32.xlu0 %v282, 127
        %v543 = vpop.permute.xlu0 %542
        %544 = vrot.lane.b32.xlu0 %v284, 127
        %v545 = vpop.permute.xlu0 %544
        %546 = vrot.lane.b32.xlu0 %v285, 127
        %v547 = vpop.permute.xlu0 %546
        %548 = vrot.lane.b32.xlu0 %v287, 127
        %v549 = vpop.permute.xlu0 %548
        %550 = vrot.lane.b32.xlu0 %v288, 127
        %v551 = vpop.permute.xlu0 %550
        %v554 = vpack.i.b16 %v541, %v537
        %v555 = vshrl.u32 %v537, 16
        %v556 = vshrl.u32 %v541, 16
        %v557 = vpack.i.b16 %v556, %v555
        %v560 = vpack.i.b16 %v549, %v545
        %v561 = vshrl.u32 %v545, 16
        %v562 = vshrl.u32 %v549, 16
        %v563 = vpack.i.b16 %v562, %v561
        %v566 = vpack.i.b16 %v543, %v539
        %v567 = vshrl.u32 %v539, 16
        %v568 = vshrl.u32 %v543, 16
        %v569 = vpack.i.b16 %v568, %v567
        %v572 = vpack.i.b16 %v551, %v547
        %v573 = vshrl.u32 %v547, 16
        %v574 = vshrl.u32 %v551, 16
        %v575 = vpack.i.b16 %v574, %v573
        %v578 = vunpack.c.l.s4 1983009808
        %v579 = vunpack.c.0.s8 %v578
        %v580 = vperm.slane %v554, %v579
        %v583 = vunpack.c.l.s4 1983009808
        %v584 = vunpack.c.0.s8 %v583
        %v585 = vperm.slane %v560, %v584
        %v586 = vrot.slane %v585, 4
        %v587 = vsel %vm327, %v586, %v580
        %v588 = vrot.slane %v580, 4
        %v589 = vsel %vm327, %v585, %v588
        %v591 = vunpack.c.l.s4 1934713408
        %v592 = vunpack.c.0.s8 %v591
        %v593 = vperm.slane %v587, %v592
        %v595 = vunpack.c.l.s4 1934713408
        %v596 = vunpack.c.0.s8 %v595
        %v597 = vperm.slane %v589, %v596
        %v598 = vrot.slane %v593, 4
        %v599 = vsel %vm327, 0, %v598
        %v600 = vrot.slane %v597, 4
        %v601 = vsel %vm327, 0, %v600
        %v604 = vunpack.c.l.s4 1983009808
        %v605 = vunpack.c.0.s8 %v604
        %v606 = vperm.slane %v557, %v605
        %v609 = vunpack.c.l.s4 1983009808
        %v610 = vunpack.c.0.s8 %v609
        %v611 = vperm.slane %v563, %v610
        %v612 = vrot.slane %v611, 4
        %v613 = vsel %vm327, %v612, %v606
        %v614 = vrot.slane %v606, 4
        %v615 = vsel %vm327, %v611, %v614
        %v617 = vunpack.c.l.s4 1934713408
        %v618 = vunpack.c.0.s8 %v617
        %v619 = vperm.slane %v613, %v618
        %v621 = vunpack.c.l.s4 1934713408
        %v622 = vunpack.c.0.s8 %v621
        %v623 = vperm.slane %v615, %v622
        %v624 = vrot.slane %v619, 4
        %v625 = vsel %vm327, 0, %v624
        %v626 = vrot.slane %v623, 4
        %v627 = vsel %vm327, 0, %v626
        %v630 = vunpack.c.l.s4 1983009808
        %v631 = vunpack.c.0.s8 %v630
        %v632 = vperm.slane %v566, %v631
        %v635 = vunpack.c.l.s4 1983009808
        %v636 = vunpack.c.0.s8 %v635
        %v637 = vperm.slane %v572, %v636
        %v638 = vrot.slane %v637, 4
        %v639 = vsel %vm327, %v638, %v632
        %v640 = vrot.slane %v632, 4
        %v641 = vsel %vm327, %v637, %v640
        %v643 = vunpack.c.l.s4 1934713408
        %v644 = vunpack.c.0.s8 %v643
        %v645 = vperm.slane %v639, %v644
        %v647 = vunpack.c.l.s4 1934713408
        %v648 = vunpack.c.0.s8 %v647
        %v649 = vperm.slane %v641, %v648
        %v650 = vrot.slane %v645, 4
        %v651 = vsel %vm327, 0, %v650
        %v652 = vrot.slane %v649, 4
        %v653 = vsel %vm327, 0, %v652
        %v656 = vunpack.c.l.s4 1983009808
        %v657 = vunpack.c.0.s8 %v656
        %v658 = vperm.slane %v569, %v657
        %v661 = vunpack.c.l.s4 1983009808
        %v662 = vunpack.c.0.s8 %v661
        %v663 = vperm.slane %v575, %v662
        %v664 = vrot.slane %v663, 4
        %v665 = vsel %vm327, %v664, %v658
        %v666 = vrot.slane %v658, 4
        %v667 = vsel %vm327, %v663, %v666
        %v669 = vunpack.c.l.s4 1934713408
        %v670 = vunpack.c.0.s8 %v669
        %v671 = vperm.slane %v665, %v670
        %v673 = vunpack.c.l.s4 1934713408
        %v674 = vunpack.c.0.s8 %v673
        %v675 = vperm.slane %v667, %v674
        %v676 = vrot.slane %v671, 4
        %v677 = vsel %vm327, 0, %v676
        %v678 = vrot.slane %v675, 4
        %v679 = vsel %vm327, 0, %v678
        %v681 = vunpack.c.l.b16 %v619
        %v682 = vpack.c.b16 %v681, %v681
        %683 = vrot.lane.b32.xlu0 %v682, 16
        %v684 = vpop.permute.xlu0 %683
        %v686 = vunpack.c.l.b16 %v599
        %v687 = vpack.c.b16 %v686, %v686
        %688 = vrot.lane.b32.xlu0 %v687, 32
        %v689 = vpop.permute.xlu0 %688
        %v691 = vunpack.c.l.b16 %v625
        %v692 = vpack.c.b16 %v691, %v691
        %693 = vrot.lane.b32.xlu0 %v692, 48
        %v694 = vpop.permute.xlu0 %693
        %v696 = vunpack.c.l.b16 %v597
        %v697 = vpack.c.b16 %v696, %v696
        %698 = vrot.lane.b32.xlu0 %v697, 64
        %v699 = vpop.permute.xlu0 %698
        %v701 = vunpack.c.l.b16 %v623
        %v702 = vpack.c.b16 %v701, %v701
        %703 = vrot.lane.b32.xlu0 %v702, 80
        %v704 = vpop.permute.xlu0 %703
        %v706 = vunpack.c.l.b16 %v601
        %v707 = vpack.c.b16 %v706, %v706
        %708 = vrot.lane.b32.xlu0 %v707, 96
        %v709 = vpop.permute.xlu0 %708
        %v711 = vunpack.c.l.b16 %v627
        %v712 = vpack.c.b16 %v711, %v711
        %713 = vrot.lane.b32.xlu0 %v712, 112
        %v714 = vpop.permute.xlu0 %713
        %v716 = vunpack.c.l.b16 %v671
        %v717 = vpack.c.b16 %v716, %v716
        %718 = vrot.lane.b32.xlu0 %v717, 16
        %v719 = vpop.permute.xlu0 %718
        %v721 = vunpack.c.l.b16 %v651
        %v722 = vpack.c.b16 %v721, %v721
        %723 = vrot.lane.b32.xlu0 %v722, 32
        %v724 = vpop.permute.xlu0 %723
        %v726 = vunpack.c.l.b16 %v677
        %v727 = vpack.c.b16 %v726, %v726
        %728 = vrot.lane.b32.xlu0 %v727, 48
        %v729 = vpop.permute.xlu0 %728
        %v731 = vunpack.c.l.b16 %v649
        %v732 = vpack.c.b16 %v731, %v731
        %733 = vrot.lane.b32.xlu0 %v732, 64
        %v734 = vpop.permute.xlu0 %733
        %v736 = vunpack.c.l.b16 %v675
        %v737 = vpack.c.b16 %v736, %v736
        %738 = vrot.lane.b32.xlu0 %v737, 80
        %v739 = vpop.permute.xlu0 %738
        %v741 = vunpack.c.l.b16 %v653
        %v742 = vpack.c.b16 %v741, %v741
        %743 = vrot.lane.b32.xlu0 %v742, 96
        %v744 = vpop.permute.xlu0 %743
        %v746 = vunpack.c.l.b16 %v679
        %v747 = vpack.c.b16 %v746, %v746
        %748 = vrot.lane.b32.xlu0 %v747, 112
        %v749 = vpop.permute.xlu0 %748
        %v752 = vsel %vm491, %v593, %v684
        %v754 = vsel %vm495, %v752, %v689
        %v756 = vsel %vm498, %v754, %v694
        %v758 = vsel %vm501, %v756, %v699
        %v760 = vsel %vm504, %v758, %v704
        %v762 = vsel %vm507, %v760, %v709
        %v764 = vsel %vm510, %v762, %v714
        %v767 = vsel %vm491, %v645, %v719
        %v769 = vsel %vm495, %v767, %v724
        %v771 = vsel %vm498, %v769, %v729
        %v773 = vsel %vm501, %v771, %v734
        %v775 = vsel %vm504, %v773, %v739
        %v777 = vsel %vm507, %v775, %v744
        %v779 = vsel %vm510, %v777, %v749
        %780 = vrot.lane.b32.xlu0 %v278, 126
        %v781 = vpop.permute.xlu0 %780
        %782 = vrot.lane.b32.xlu0 %v279, 126
        %v783 = vpop.permute.xlu0 %782
        %784 = vrot.lane.b32.xlu0 %v281, 126
        %v785 = vpop.permute.xlu0 %784
        %786 = vrot.lane.b32.xlu0 %v282, 126
        %v787 = vpop.permute.xlu0 %786
        %788 = vrot.lane.b32.xlu0 %v284, 126
        %v789 = vpop.permute.xlu0 %788
        %790 = vrot.lane.b32.xlu0 %v285, 126
        %v791 = vpop.permute.xlu0 %790
        %792 = vrot.lane.b32.xlu0 %v287, 126
        %v793 = vpop.permute.xlu0 %792
        %794 = vrot.lane.b32.xlu0 %v288, 126
        %v795 = vpop.permute.xlu0 %794
        %v798 = vpack.i.b16 %v785, %v781
        %v799 = vshrl.u32 %v781, 16
        %v800 = vshrl.u32 %v785, 16
        %v801 = vpack.i.b16 %v800, %v799
        %v804 = vpack.i.b16 %v793, %v789
        %v805 = vshrl.u32 %v789, 16
        %v806 = vshrl.u32 %v793, 16
        %v807 = vpack.i.b16 %v806, %v805
        %v810 = vpack.i.b16 %v787, %v783
        %v811 = vshrl.u32 %v783, 16
        %v812 = vshrl.u32 %v787, 16
        %v813 = vpack.i.b16 %v812, %v811
        %v816 = vpack.i.b16 %v795, %v791
        %v817 = vshrl.u32 %v791, 16
        %v818 = vshrl.u32 %v795, 16
        %v819 = vpack.i.b16 %v818, %v817
        %v822 = vunpack.c.l.s4 1983009808
        %v823 = vunpack.c.0.s8 %v822
        %v824 = vperm.slane %v798, %v823
        %v827 = vunpack.c.l.s4 1983009808
        %v828 = vunpack.c.0.s8 %v827
        %v829 = vperm.slane %v804, %v828
        %v830 = vrot.slane %v829, 4
        %v831 = vsel %vm327, %v830, %v824
        %v832 = vrot.slane %v824, 4
        %v833 = vsel %vm327, %v829, %v832
        %v835 = vunpack.c.l.s4 1934713408
        %v836 = vunpack.c.0.s8 %v835
        %v837 = vperm.slane %v831, %v836
        %v839 = vunpack.c.l.s4 1934713408
        %v840 = vunpack.c.0.s8 %v839
        %v841 = vperm.slane %v833, %v840
        %v842 = vrot.slane %v837, 4
        %v843 = vsel %vm327, 0, %v842
        %v844 = vrot.slane %v841, 4
        %v845 = vsel %vm327, 0, %v844
        %v848 = vunpack.c.l.s4 1983009808
        %v849 = vunpack.c.0.s8 %v848
        %v850 = vperm.slane %v801, %v849
        %v853 = vunpack.c.l.s4 1983009808
        %v854 = vunpack.c.0.s8 %v853
        %v855 = vperm.slane %v807, %v854
        %v856 = vrot.slane %v855, 4
        %v857 = vsel %vm327, %v856, %v850
        %v858 = vrot.slane %v850, 4
        %v859 = vsel %vm327, %v855, %v858
        %v861 = vunpack.c.l.s4 1934713408
        %v862 = vunpack.c.0.s8 %v861
        %v863 = vperm.slane %v857, %v862
        %v865 = vunpack.c.l.s4 1934713408
        %v866 = vunpack.c.0.s8 %v865
        %v867 = vperm.slane %v859, %v866
        %v868 = vrot.slane %v863, 4
        %v869 = vsel %vm327, 0, %v868
        %v870 = vrot.slane %v867, 4
        %v871 = vsel %vm327, 0, %v870
        %v874 = vunpack.c.l.s4 1983009808
        %v875 = vunpack.c.0.s8 %v874
        %v876 = vperm.slane %v810, %v875
        %v879 = vunpack.c.l.s4 1983009808
        %v880 = vunpack.c.0.s8 %v879
        %v881 = vperm.slane %v816, %v880
        %v882 = vrot.slane %v881, 4
        %v883 = vsel %vm327, %v882, %v876
        %v884 = vrot.slane %v876, 4
        %v885 = vsel %vm327, %v881, %v884
        %v887 = vunpack.c.l.s4 1934713408
        %v888 = vunpack.c.0.s8 %v887
        %v889 = vperm.slane %v883, %v888
        %v891 = vunpack.c.l.s4 1934713408
        %v892 = vunpack.c.0.s8 %v891
        %v893 = vperm.slane %v885, %v892
        %v894 = vrot.slane %v889, 4
        %v895 = vsel %vm327, 0, %v894
        %v896 = vrot.slane %v893, 4
        %v897 = vsel %vm327, 0, %v896
        %v900 = vunpack.c.l.s4 1983009808
        %v901 = vunpack.c.0.s8 %v900
        %v902 = vperm.slane %v813, %v901
        %v905 = vunpack.c.l.s4 1983009808
        %v906 = vunpack.c.0.s8 %v905
        %v907 = vperm.slane %v819, %v906
        %v908 = vrot.slane %v907, 4
        %v909 = vsel %vm327, %v908, %v902
        %v910 = vrot.slane %v902, 4
        %v911 = vsel %vm327, %v907, %v910
        %v913 = vunpack.c.l.s4 1934713408
        %v914 = vunpack.c.0.s8 %v913
        %v915 = vperm.slane %v909, %v914
        %v917 = vunpack.c.l.s4 1934713408
        %v918 = vunpack.c.0.s8 %v917
        %v919 = vperm.slane %v911, %v918
        %v920 = vrot.slane %v915, 4
        %v921 = vsel %vm327, 0, %v920
        %v922 = vrot.slane %v919, 4
        %v923 = vsel %vm327, 0, %v922
        %v925 = vunpack.c.l.b16 %v863
        %v926 = vpack.c.b16 %v925, %v925
        %927 = vrot.lane.b32.xlu0 %v926, 16
        %v928 = vpop.permute.xlu0 %927
        %v930 = vunpack.c.l.b16 %v843
        %v931 = vpack.c.b16 %v930, %v930
        %932 = vrot.lane.b32.xlu0 %v931, 32
        %v933 = vpop.permute.xlu0 %932
        %v935 = vunpack.c.l.b16 %v869
        %v936 = vpack.c.b16 %v935, %v935
        %937 = vrot.lane.b32.xlu0 %v936, 48
        %v938 = vpop.permute.xlu0 %937
        %v940 = vunpack.c.l.b16 %v841
        %v941 = vpack.c.b16 %v940, %v940
        %942 = vrot.lane.b32.xlu0 %v941, 64
        %v943 = vpop.permute.xlu0 %942
        %v945 = vunpack.c.l.b16 %v867
        %v946 = vpack.c.b16 %v945, %v945
        %947 = vrot.lane.b32.xlu0 %v946, 80
        %v948 = vpop.permute.xlu0 %947
        %v950 = vunpack.c.l.b16 %v845
        %v951 = vpack.c.b16 %v950, %v950
        %952 = vrot.lane.b32.xlu0 %v951, 96
        %v953 = vpop.permute.xlu0 %952
        %v955 = vunpack.c.l.b16 %v871
        %v956 = vpack.c.b16 %v955, %v955
        %957 = vrot.lane.b32.xlu0 %v956, 112
        %v958 = vpop.permute.xlu0 %957
        %v960 = vunpack.c.l.b16 %v915
        %v961 = vpack.c.b16 %v960, %v960
        %962 = vrot.lane.b32.xlu0 %v961, 16
        %v963 = vpop.permute.xlu0 %962
        %v965 = vunpack.c.l.b16 %v895
        %v966 = vpack.c.b16 %v965, %v965
        %967 = vrot.lane.b32.xlu0 %v966, 32
        %v968 = vpop.permute.xlu0 %967
        %v970 = vunpack.c.l.b16 %v921
        %v971 = vpack.c.b16 %v970, %v970
        %972 = vrot.lane.b32.xlu0 %v971, 48
        %v973 = vpop.permute.xlu0 %972
        %v975 = vunpack.c.l.b16 %v893
        %v976 = vpack.c.b16 %v975, %v975
        %977 = vrot.lane.b32.xlu0 %v976, 64
        %v978 = vpop.permute.xlu0 %977
        %v980 = vunpack.c.l.b16 %v919
        %v981 = vpack.c.b16 %v980, %v980
        %982 = vrot.lane.b32.xlu0 %v981, 80
        %v983 = vpop.permute.xlu0 %982
        %v985 = vunpack.c.l.b16 %v897
        %v986 = vpack.c.b16 %v985, %v985
        %987 = vrot.lane.b32.xlu0 %v986, 96
        %v988 = vpop.permute.xlu0 %987
        %v990 = vunpack.c.l.b16 %v923
        %v991 = vpack.c.b16 %v990, %v990
        %992 = vrot.lane.b32.xlu0 %v991, 112
        %v993 = vpop.permute.xlu0 %992
        %v996 = vsel %vm491, %v837, %v928
        %v998 = vsel %vm495, %v996, %v933
        %v1000 = vsel %vm498, %v998, %v938
        %v1002 = vsel %vm501, %v1000, %v943
        %v1004 = vsel %vm504, %v1002, %v948
        %v1006 = vsel %vm507, %v1004, %v953
        %v1008 = vsel %vm510, %v1006, %v958
        %v1011 = vsel %vm491, %v889, %v963
        %v1013 = vsel %vm495, %v1011, %v968
        %v1015 = vsel %vm498, %v1013, %v973
        %v1017 = vsel %vm501, %v1015, %v978
        %v1019 = vsel %vm504, %v1017, %v983
        %v1021 = vsel %vm507, %v1019, %v988
        %v1023 = vsel %vm510, %v1021, %v993
        %vm1024 = vsmask.f32 3328
        %vm1025 = vsmask.f32 7440
        %vm1026 = vmor %vm1024, %vm1025
        %v1028 = vrot.slane %v295, 4
        %v1029 = vshll.u32 %v278, 16
        %v1031 = vrot.slane %v1029, 5
        %v1032 = vor.u32 %v1028, %v1031
        %v1033 = vrot.slane %v1032, 4
        %v1034 = vshll.u32 %v279, 16
        %v1036 = vrot.slane %v1034, 5
        %v1037 = vsel %vm1026, %v1033, %v1036
        %v1039 = vrot.slane %v307, 4
        %v1040 = vor.u32 %v1039, %v1036
        %v1041 = vrot.slane %v1040, 4
        %v1043 = vshll.u32 %v280, 16
        %v1045 = vrot.slane %v1043, 5
        %v1046 = vsel %vm1026, %v1041, %v1045
        %v1048 = vrot.slane %v296, 4
        %v1049 = vshll.u32 %v281, 16
        %v1051 = vrot.slane %v1049, 5
        %v1052 = vor.u32 %v1048, %v1051
        %v1053 = vrot.slane %v1052, 4
        %v1054 = vshll.u32 %v282, 16
        %v1056 = vrot.slane %v1054, 5
        %v1057 = vsel %vm1026, %v1053, %v1056
        %v1059 = vrot.slane %v308, 4
        %v1060 = vor.u32 %v1059, %v1056
        %v1061 = vrot.slane %v1060, 4
        %v1063 = vshll.u32 %v283, 16
        %v1065 = vrot.slane %v1063, 5
        %v1066 = vsel %vm1026, %v1061, %v1065
        %v1068 = vrot.slane %v301, 4
        %v1069 = vshll.u32 %v284, 16
        %v1071 = vrot.slane %v1069, 5
        %v1072 = vor.u32 %v1068, %v1071
        %v1073 = vrot.slane %v1072, 4
        %v1074 = vshll.u32 %v285, 16
        %v1076 = vrot.slane %v1074, 5
        %v1077 = vsel %vm1026, %v1073, %v1076
        %v1079 = vrot.slane %v313, 4
        %v1080 = vor.u32 %v1079, %v1076
        %v1081 = vrot.slane %v1080, 4
        %v1083 = vshll.u32 %v286, 16
        %v1085 = vrot.slane %v1083, 5
        %v1086 = vsel %vm1026, %v1081, %v1085
        %v1088 = vrot.slane %v302, 4
        %v1089 = vshll.u32 %v287, 16
        %v1091 = vrot.slane %v1089, 5
        %v1092 = vor.u32 %v1088, %v1091
        %v1093 = vrot.slane %v1092, 4
        %v1094 = vshll.u32 %v288, 16
        %v1096 = vrot.slane %v1094, 5
        %v1097 = vsel %vm1026, %v1093, %v1096
        %v1099 = vrot.slane %v314, 4
        %v1100 = vor.u32 %v1099, %v1096
        %v1101 = vrot.slane %v1100, 4
        %v1103 = vshll.u32 %v289, 16
        %v1105 = vrot.slane %v1103, 5
        %v1106 = vsel %vm1026, %v1101, %v1105
        %v1109 = vpack.i.b16 %v1057, %v1037
        %v1110 = vshrl.u32 %v1037, 16
        %v1111 = vshrl.u32 %v1057, 16
        %v1112 = vpack.i.b16 %v1111, %v1110
        %v1115 = vpack.i.b16 %v1097, %v1077
        %v1116 = vshrl.u32 %v1077, 16
        %v1117 = vshrl.u32 %v1097, 16
        %v1118 = vpack.i.b16 %v1117, %v1116
        %v1121 = vpack.i.b16 %v1066, %v1046
        %v1122 = vshrl.u32 %v1046, 16
        %v1123 = vshrl.u32 %v1066, 16
        %v1124 = vpack.i.b16 %v1123, %v1122
        %v1127 = vpack.i.b16 %v1106, %v1086
        %v1128 = vshrl.u32 %v1086, 16
        %v1129 = vshrl.u32 %v1106, 16
        %v1130 = vpack.i.b16 %v1129, %v1128
        %v1133 = vunpack.c.l.s4 1983009808
        %v1134 = vunpack.c.0.s8 %v1133
        %v1135 = vperm.slane %v1109, %v1134
        %v1138 = vunpack.c.l.s4 1983009808
        %v1139 = vunpack.c.0.s8 %v1138
        %v1140 = vperm.slane %v1115, %v1139
        %v1141 = vrot.slane %v1140, 4
        %v1142 = vsel %vm327, %v1141, %v1135
        %v1143 = vrot.slane %v1135, 4
        %v1144 = vsel %vm327, %v1140, %v1143
        %v1146 = vunpack.c.l.s4 1934713408
        %v1147 = vunpack.c.0.s8 %v1146
        %v1148 = vperm.slane %v1142, %v1147
        %v1150 = vunpack.c.l.s4 1934713408
        %v1151 = vunpack.c.0.s8 %v1150
        %v1152 = vperm.slane %v1144, %v1151
        %v1153 = vrot.slane %v1148, 4
        %v1154 = vsel %vm327, 0, %v1153
        %v1155 = vrot.slane %v1152, 4
        %v1156 = vsel %vm327, 0, %v1155
        %v1159 = vunpack.c.l.s4 1983009808
        %v1160 = vunpack.c.0.s8 %v1159
        %v1161 = vperm.slane %v1112, %v1160
        %v1164 = vunpack.c.l.s4 1983009808
        %v1165 = vunpack.c.0.s8 %v1164
        %v1166 = vperm.slane %v1118, %v1165
        %v1167 = vrot.slane %v1166, 4
        %v1168 = vsel %vm327, %v1167, %v1161
        %v1169 = vrot.slane %v1161, 4
        %v1170 = vsel %vm327, %v1166, %v1169
        %v1172 = vunpack.c.l.s4 1934713408
        %v1173 = vunpack.c.0.s8 %v1172
        %v1174 = vperm.slane %v1168, %v1173
        %v1176 = vunpack.c.l.s4 1934713408
        %v1177 = vunpack.c.0.s8 %v1176
        %v1178 = vperm.slane %v1170, %v1177
        %v1179 = vrot.slane %v1174, 4
        %v1180 = vsel %vm327, 0, %v1179
        %v1181 = vrot.slane %v1178, 4
        %v1182 = vsel %vm327, 0, %v1181
        %v1185 = vunpack.c.l.s4 1983009808
        %v1186 = vunpack.c.0.s8 %v1185
        %v1187 = vperm.slane %v1121, %v1186
        %v1190 = vunpack.c.l.s4 1983009808
        %v1191 = vunpack.c.0.s8 %v1190
        %v1192 = vperm.slane %v1127, %v1191
        %v1193 = vrot.slane %v1192, 4
        %v1194 = vsel %vm327, %v1193, %v1187
        %v1195 = vrot.slane %v1187, 4
        %v1196 = vsel %vm327, %v1192, %v1195
        %v1198 = vunpack.c.l.s4 1934713408
        %v1199 = vunpack.c.0.s8 %v1198
        %v1200 = vperm.slane %v1194, %v1199
        %v1202 = vunpack.c.l.s4 1934713408
        %v1203 = vunpack.c.0.s8 %v1202
        %v1204 = vperm.slane %v1196, %v1203
        %v1205 = vrot.slane %v1200, 4
        %v1206 = vsel %vm327, 0, %v1205
        %v1207 = vrot.slane %v1204, 4
        %v1208 = vsel %vm327, 0, %v1207
        %v1211 = vunpack.c.l.s4 1983009808
        %v1212 = vunpack.c.0.s8 %v1211
        %v1213 = vperm.slane %v1124, %v1212
        %v1216 = vunpack.c.l.s4 1983009808
        %v1217 = vunpack.c.0.s8 %v1216
        %v1218 = vperm.slane %v1130, %v1217
        %v1219 = vrot.slane %v1218, 4
        %v1220 = vsel %vm327, %v1219, %v1213
        %v1221 = vrot.slane %v1213, 4
        %v1222 = vsel %vm327, %v1218, %v1221
        %v1224 = vunpack.c.l.s4 1934713408
        %v1225 = vunpack.c.0.s8 %v1224
        %v1226 = vperm.slane %v1220, %v1225
        %v1228 = vunpack.c.l.s4 1934713408
        %v1229 = vunpack.c.0.s8 %v1228
        %v1230 = vperm.slane %v1222, %v1229
        %v1231 = vrot.slane %v1226, 4
        %v1232 = vsel %vm327, 0, %v1231
        %v1233 = vrot.slane %v1230, 4
        %v1234 = vsel %vm327, 0, %v1233
        %v1236 = vunpack.c.l.b16 %v1174
        %v1237 = vpack.c.b16 %v1236, %v1236
        %1238 = vrot.lane.b32.xlu0 %v1237, 16
        %v1239 = vpop.permute.xlu0 %1238
        %v1241 = vunpack.c.l.b16 %v1154
        %v1242 = vpack.c.b16 %v1241, %v1241
        %1243 = vrot.lane.b32.xlu0 %v1242, 32
        %v1244 = vpop.permute.xlu0 %1243
        %v1246 = vunpack.c.l.b16 %v1180
        %v1247 = vpack.c.b16 %v1246, %v1246
        %1248 = vrot.lane.b32.xlu0 %v1247, 48
        %v1249 = vpop.permute.xlu0 %1248
        %v1251 = vunpack.c.l.b16 %v1152
        %v1252 = vpack.c.b16 %v1251, %v1251
        %1253 = vrot.lane.b32.xlu0 %v1252, 64
        %v1254 = vpop.permute.xlu0 %1253
        %v1256 = vunpack.c.l.b16 %v1178
        %v1257 = vpack.c.b16 %v1256, %v1256
        %1258 = vrot.lane.b32.xlu0 %v1257, 80
        %v1259 = vpop.permute.xlu0 %1258
        %v1261 = vunpack.c.l.b16 %v1156
        %v1262 = vpack.c.b16 %v1261, %v1261
        %1263 = vrot.lane.b32.xlu0 %v1262, 96
        %v1264 = vpop.permute.xlu0 %1263
        %v1266 = vunpack.c.l.b16 %v1182
        %v1267 = vpack.c.b16 %v1266, %v1266
        %1268 = vrot.lane.b32.xlu0 %v1267, 112
        %v1269 = vpop.permute.xlu0 %1268
        %v1271 = vunpack.c.l.b16 %v1226
        %v1272 = vpack.c.b16 %v1271, %v1271
        %1273 = vrot.lane.b32.xlu0 %v1272, 16
        %v1274 = vpop.permute.xlu0 %1273
        %v1276 = vunpack.c.l.b16 %v1206
        %v1277 = vpack.c.b16 %v1276, %v1276
        %1278 = vrot.lane.b32.xlu0 %v1277, 32
        %v1279 = vpop.permute.xlu0 %1278
        %v1281 = vunpack.c.l.b16 %v1232
        %v1282 = vpack.c.b16 %v1281, %v1281
        %1283 = vrot.lane.b32.xlu0 %v1282, 48
        %v1284 = vpop.permute.xlu0 %1283
        %v1286 = vunpack.c.l.b16 %v1204
        %v1287 = vpack.c.b16 %v1286, %v1286
        %1288 = vrot.lane.b32.xlu0 %v1287, 64
        %v1289 = vpop.permute.xlu0 %1288
        %v1291 = vunpack.c.l.b16 %v1230
        %v1292 = vpack.c.b16 %v1291, %v1291
        %1293 = vrot.lane.b32.xlu0 %v1292, 80
        %v1294 = vpop.permute.xlu0 %1293
        %v1296 = vunpack.c.l.b16 %v1208
        %v1297 = vpack.c.b16 %v1296, %v1296
        %1298 = vrot.lane.b32.xlu0 %v1297, 96
        %v1299 = vpop.permute.xlu0 %1298
        %v1301 = vunpack.c.l.b16 %v1234
        %v1302 = vpack.c.b16 %v1301, %v1301
        %1303 = vrot.lane.b32.xlu0 %v1302, 112
        %v1304 = vpop.permute.xlu0 %1303
        %v1307 = vsel %vm491, %v1148, %v1239
        %v1309 = vsel %vm495, %v1307, %v1244
        %v1311 = vsel %vm498, %v1309, %v1249
        %v1313 = vsel %vm501, %v1311, %v1254
        %v1315 = vsel %vm504, %v1313, %v1259
        %v1317 = vsel %vm507, %v1315, %v1264
        %v1319 = vsel %vm510, %v1317, %v1269
        %v1322 = vsel %vm491, %v1200, %v1274
        %v1324 = vsel %vm495, %v1322, %v1279
        %v1326 = vsel %vm498, %v1324, %v1284
        %v1328 = vsel %vm501, %v1326, %v1289
        %v1330 = vsel %vm504, %v1328, %v1294
        %v1332 = vsel %vm507, %v1330, %v1299
        %v1334 = vsel %vm510, %v1332, %v1304
        %1335 = vrot.lane.b32.xlu0 %v1037, 127
        %v1336 = vpop.permute.xlu0 %1335
        %1337 = vrot.lane.b32.xlu0 %v1046, 127
        %v1338 = vpop.permute.xlu0 %1337
        %1339 = vrot.lane.b32.xlu0 %v1057, 127
        %v1340 = vpop.permute.xlu0 %1339
        %1341 = vrot.lane.b32.xlu0 %v1066, 127
        %v1342 = vpop.permute.xlu0 %1341
        %1343 = vrot.lane.b32.xlu0 %v1077, 127
        %v1344 = vpop.permute.xlu0 %1343
        %1345 = vrot.lane.b32.xlu0 %v1086, 127
        %v1346 = vpop.permute.xlu0 %1345
        %1347 = vrot.lane.b32.xlu0 %v1097, 127
        %v1348 = vpop.permute.xlu0 %1347
        %1349 = vrot.lane.b32.xlu0 %v1106, 127
        %v1350 = vpop.permute.xlu0 %1349
        %v1353 = vpack.i.b16 %v1340, %v1336
        %v1354 = vshrl.u32 %v1336, 16
        %v1355 = vshrl.u32 %v1340, 16
        %v1356 = vpack.i.b16 %v1355, %v1354
        %v1359 = vpack.i.b16 %v1348, %v1344
        %v1360 = vshrl.u32 %v1344, 16
        %v1361 = vshrl.u32 %v1348, 16
        %v1362 = vpack.i.b16 %v1361, %v1360
        %v1365 = vpack.i.b16 %v1342, %v1338
        %v1366 = vshrl.u32 %v1338, 16
        %v1367 = vshrl.u32 %v1342, 16
        %v1368 = vpack.i.b16 %v1367, %v1366
        %v1371 = vpack.i.b16 %v1350, %v1346
        %v1372 = vshrl.u32 %v1346, 16
        %v1373 = vshrl.u32 %v1350, 16
        %v1374 = vpack.i.b16 %v1373, %v1372
        %v1377 = vunpack.c.l.s4 1983009808
        %v1378 = vunpack.c.0.s8 %v1377
        %v1379 = vperm.slane %v1353, %v1378
        %v1382 = vunpack.c.l.s4 1983009808
        %v1383 = vunpack.c.0.s8 %v1382
        %v1384 = vperm.slane %v1359, %v1383
        %v1385 = vrot.slane %v1384, 4
        %v1386 = vsel %vm327, %v1385, %v1379
        %v1387 = vrot.slane %v1379, 4
        %v1388 = vsel %vm327, %v1384, %v1387
        %v1390 = vunpack.c.l.s4 1934713408
        %v1391 = vunpack.c.0.s8 %v1390
        %v1392 = vperm.slane %v1386, %v1391
        %v1394 = vunpack.c.l.s4 1934713408
        %v1395 = vunpack.c.0.s8 %v1394
        %v1396 = vperm.slane %v1388, %v1395
        %v1397 = vrot.slane %v1392, 4
        %v1398 = vsel %vm327, 0, %v1397
        %v1399 = vrot.slane %v1396, 4
        %v1400 = vsel %vm327, 0, %v1399
        %v1403 = vunpack.c.l.s4 1983009808
        %v1404 = vunpack.c.0.s8 %v1403
        %v1405 = vperm.slane %v1356, %v1404
        %v1408 = vunpack.c.l.s4 1983009808
        %v1409 = vunpack.c.0.s8 %v1408
        %v1410 = vperm.slane %v1362, %v1409
        %v1411 = vrot.slane %v1410, 4
        %v1412 = vsel %vm327, %v1411, %v1405
        %v1413 = vrot.slane %v1405, 4
        %v1414 = vsel %vm327, %v1410, %v1413
        %v1416 = vunpack.c.l.s4 1934713408
        %v1417 = vunpack.c.0.s8 %v1416
        %v1418 = vperm.slane %v1412, %v1417
        %v1420 = vunpack.c.l.s4 1934713408
        %v1421 = vunpack.c.0.s8 %v1420
        %v1422 = vperm.slane %v1414, %v1421
        %v1423 = vrot.slane %v1418, 4
        %v1424 = vsel %vm327, 0, %v1423
        %v1425 = vrot.slane %v1422, 4
        %v1426 = vsel %vm327, 0, %v1425
        %v1429 = vunpack.c.l.s4 1983009808
        %v1430 = vunpack.c.0.s8 %v1429
        %v1431 = vperm.slane %v1365, %v1430
        %v1434 = vunpack.c.l.s4 1983009808
        %v1435 = vunpack.c.0.s8 %v1434
        %v1436 = vperm.slane %v1371, %v1435
        %v1437 = vrot.slane %v1436, 4
        %v1438 = vsel %vm327, %v1437, %v1431
        %v1439 = vrot.slane %v1431, 4
        %v1440 = vsel %vm327, %v1436, %v1439
        %v1442 = vunpack.c.l.s4 1934713408
        %v1443 = vunpack.c.0.s8 %v1442
        %v1444 = vperm.slane %v1438, %v1443
        %v1446 = vunpack.c.l.s4 1934713408
        %v1447 = vunpack.c.0.s8 %v1446
        %v1448 = vperm.slane %v1440, %v1447
        %v1449 = vrot.slane %v1444, 4
        %v1450 = vsel %vm327, 0, %v1449
        %v1451 = vrot.slane %v1448, 4
        %v1452 = vsel %vm327, 0, %v1451
        %v1455 = vunpack.c.l.s4 1983009808
        %v1456 = vunpack.c.0.s8 %v1455
        %v1457 = vperm.slane %v1368, %v1456
        %v1460 = vunpack.c.l.s4 1983009808
        %v1461 = vunpack.c.0.s8 %v1460
        %v1462 = vperm.slane %v1374, %v1461
        %v1463 = vrot.slane %v1462, 4
        %v1464 = vsel %vm327, %v1463, %v1457
        %v1465 = vrot.slane %v1457, 4
        %v1466 = vsel %vm327, %v1462, %v1465
        %v1468 = vunpack.c.l.s4 1934713408
        %v1469 = vunpack.c.0.s8 %v1468
        %v1470 = vperm.slane %v1464, %v1469
        %v1472 = vunpack.c.l.s4 1934713408
        %v1473 = vunpack.c.0.s8 %v1472
        %v1474 = vperm.slane %v1466, %v1473
        %v1475 = vrot.slane %v1470, 4
        %v1476 = vsel %vm327, 0, %v1475
        %v1477 = vrot.slane %v1474, 4
        %v1478 = vsel %vm327, 0, %v1477
        %v1480 = vunpack.c.l.b16 %v1418
        %v1481 = vpack.c.b16 %v1480, %v1480
        %1482 = vrot.lane.b32.xlu0 %v1481, 16
        %v1483 = vpop.permute.xlu0 %1482
        %v1485 = vunpack.c.l.b16 %v1398
        %v1486 = vpack.c.b16 %v1485, %v1485
        %1487 = vrot.lane.b32.xlu0 %v1486, 32
        %v1488 = vpop.permute.xlu0 %1487
        %v1490 = vunpack.c.l.b16 %v1424
        %v1491 = vpack.c.b16 %v1490, %v1490
        %1492 = vrot.lane.b32.xlu0 %v1491, 48
        %v1493 = vpop.permute.xlu0 %1492
        %v1495 = vunpack.c.l.b16 %v1396
        %v1496 = vpack.c.b16 %v1495, %v1495
        %1497 = vrot.lane.b32.xlu0 %v1496, 64
        %v1498 = vpop.permute.xlu0 %1497
        %v1500 = vunpack.c.l.b16 %v1422
        %v1501 = vpack.c.b16 %v1500, %v1500
        %1502 = vrot.lane.b32.xlu0 %v1501, 80
        %v1503 = vpop.permute.xlu0 %1502
        %v1505 = vunpack.c.l.b16 %v1400
        %v1506 = vpack.c.b16 %v1505, %v1505
        %1507 = vrot.lane.b32.xlu0 %v1506, 96
        %v1508 = vpop.permute.xlu0 %1507
        %v1510 = vunpack.c.l.b16 %v1426
        %v1511 = vpack.c.b16 %v1510, %v1510
        %1512 = vrot.lane.b32.xlu0 %v1511, 112
        %v1513 = vpop.permute.xlu0 %1512
        %v1515 = vunpack.c.l.b16 %v1470
        %v1516 = vpack.c.b16 %v1515, %v1515
        %1517 = vrot.lane.b32.xlu0 %v1516, 16
        %v1518 = vpop.permute.xlu0 %1517
        %v1520 = vunpack.c.l.b16 %v1450
        %v1521 = vpack.c.b16 %v1520, %v1520
        %1522 = vrot.lane.b32.xlu0 %v1521, 32
        %v1523 = vpop.permute.xlu0 %1522
        %v1525 = vunpack.c.l.b16 %v1476
        %v1526 = vpack.c.b16 %v1525, %v1525
        %1527 = vrot.lane.b32.xlu0 %v1526, 48
        %v1528 = vpop.permute.xlu0 %1527
        %v1530 = vunpack.c.l.b16 %v1448
        %v1531 = vpack.c.b16 %v1530, %v1530
        %1532 = vrot.lane.b32.xlu0 %v1531, 64
        %v1533 = vpop.permute.xlu0 %1532
        %v1535 = vunpack.c.l.b16 %v1474
        %v1536 = vpack.c.b16 %v1535, %v1535
        %1537 = vrot.lane.b32.xlu0 %v1536, 80
        %v1538 = vpop.permute.xlu0 %1537
        %v1540 = vunpack.c.l.b16 %v1452
        %v1541 = vpack.c.b16 %v1540, %v1540
        %1542 = vrot.lane.b32.xlu0 %v1541, 96
        %v1543 = vpop.permute.xlu0 %1542
        %v1545 = vunpack.c.l.b16 %v1478
        %v1546 = vpack.c.b16 %v1545, %v1545
        %1547 = vrot.lane.b32.xlu0 %v1546, 112
        %v1548 = vpop.permute.xlu0 %1547
        %v1551 = vsel %vm491, %v1392, %v1483
        %v1553 = vsel %vm495, %v1551, %v1488
        %v1555 = vsel %vm498, %v1553, %v1493
        %v1557 = vsel %vm501, %v1555, %v1498
        %v1559 = vsel %vm504, %v1557, %v1503
        %v1561 = vsel %vm507, %v1559, %v1508
        %v1563 = vsel %vm510, %v1561, %v1513
        %v1566 = vsel %vm491, %v1444, %v1518
        %v1568 = vsel %vm495, %v1566, %v1523
        %v1570 = vsel %vm498, %v1568, %v1528
        %v1572 = vsel %vm501, %v1570, %v1533
        %v1574 = vsel %vm504, %v1572, %v1538
        %v1576 = vsel %vm507, %v1574, %v1543
        %v1578 = vsel %vm510, %v1576, %v1548
        %1579 = vrot.lane.b32.xlu0 %v1037, 126
        %v1580 = vpop.permute.xlu0 %1579
        %1581 = vrot.lane.b32.xlu0 %v1046, 126
        %v1582 = vpop.permute.xlu0 %1581
        %1583 = vrot.lane.b32.xlu0 %v1057, 126
        %v1584 = vpop.permute.xlu0 %1583
        %1585 = vrot.lane.b32.xlu0 %v1066, 126
        %v1586 = vpop.permute.xlu0 %1585
        %1587 = vrot.lane.b32.xlu0 %v1077, 126
        %v1588 = vpop.permute.xlu0 %1587
        %1589 = vrot.lane.b32.xlu0 %v1086, 126
        %v1590 = vpop.permute.xlu0 %1589
        %1591 = vrot.lane.b32.xlu0 %v1097, 126
        %v1592 = vpop.permute.xlu0 %1591
        %1593 = vrot.lane.b32.xlu0 %v1106, 126
        %v1594 = vpop.permute.xlu0 %1593
        %v1597 = vpack.i.b16 %v1584, %v1580
        %v1598 = vshrl.u32 %v1580, 16
        %v1599 = vshrl.u32 %v1584, 16
        %v1600 = vpack.i.b16 %v1599, %v1598
        %v1603 = vpack.i.b16 %v1592, %v1588
        %v1604 = vshrl.u32 %v1588, 16
        %v1605 = vshrl.u32 %v1592, 16
        %v1606 = vpack.i.b16 %v1605, %v1604
        %v1609 = vpack.i.b16 %v1586, %v1582
        %v1610 = vshrl.u32 %v1582, 16
        %v1611 = vshrl.u32 %v1586, 16
        %v1612 = vpack.i.b16 %v1611, %v1610
        %v1615 = vpack.i.b16 %v1594, %v1590
        %v1616 = vshrl.u32 %v1590, 16
        %v1617 = vshrl.u32 %v1594, 16
        %v1618 = vpack.i.b16 %v1617, %v1616
        %v1621 = vunpack.c.l.s4 1983009808
        %v1622 = vunpack.c.0.s8 %v1621
        %v1623 = vperm.slane %v1597, %v1622
        %v1626 = vunpack.c.l.s4 1983009808
        %v1627 = vunpack.c.0.s8 %v1626
        %v1628 = vperm.slane %v1603, %v1627
        %v1629 = vrot.slane %v1628, 4
        %v1630 = vsel %vm327, %v1629, %v1623
        %v1631 = vrot.slane %v1623, 4
        %v1632 = vsel %vm327, %v1628, %v1631
        %v1634 = vunpack.c.l.s4 1934713408
        %v1635 = vunpack.c.0.s8 %v1634
        %v1636 = vperm.slane %v1630, %v1635
        %v1638 = vunpack.c.l.s4 1934713408
        %v1639 = vunpack.c.0.s8 %v1638
        %v1640 = vperm.slane %v1632, %v1639
        %v1641 = vrot.slane %v1636, 4
        %v1642 = vsel %vm327, 0, %v1641
        %v1643 = vrot.slane %v1640, 4
        %v1644 = vsel %vm327, 0, %v1643
        %v1647 = vunpack.c.l.s4 1983009808
        %v1648 = vunpack.c.0.s8 %v1647
        %v1649 = vperm.slane %v1600, %v1648
        %v1652 = vunpack.c.l.s4 1983009808
        %v1653 = vunpack.c.0.s8 %v1652
        %v1654 = vperm.slane %v1606, %v1653
        %v1655 = vrot.slane %v1654, 4
        %v1656 = vsel %vm327, %v1655, %v1649
        %v1657 = vrot.slane %v1649, 4
        %v1658 = vsel %vm327, %v1654, %v1657
        %v1660 = vunpack.c.l.s4 1934713408
        %v1661 = vunpack.c.0.s8 %v1660
        %v1662 = vperm.slane %v1656, %v1661
        %v1664 = vunpack.c.l.s4 1934713408
        %v1665 = vunpack.c.0.s8 %v1664
        %v1666 = vperm.slane %v1658, %v1665
        %v1667 = vrot.slane %v1662, 4
        %v1668 = vsel %vm327, 0, %v1667
        %v1669 = vrot.slane %v1666, 4
        %v1670 = vsel %vm327, 0, %v1669
        %v1673 = vunpack.c.l.s4 1983009808
        %v1674 = vunpack.c.0.s8 %v1673
        %v1675 = vperm.slane %v1609, %v1674
        %v1678 = vunpack.c.l.s4 1983009808
        %v1679 = vunpack.c.0.s8 %v1678
        %v1680 = vperm.slane %v1615, %v1679
        %v1681 = vrot.slane %v1680, 4
        %v1682 = vsel %vm327, %v1681, %v1675
        %v1683 = vrot.slane %v1675, 4
        %v1684 = vsel %vm327, %v1680, %v1683
        %v1686 = vunpack.c.l.s4 1934713408
        %v1687 = vunpack.c.0.s8 %v1686
        %v1688 = vperm.slane %v1682, %v1687
        %v1690 = vunpack.c.l.s4 1934713408
        %v1691 = vunpack.c.0.s8 %v1690
        %v1692 = vperm.slane %v1684, %v1691
        %v1693 = vrot.slane %v1688, 4
        %v1694 = vsel %vm327, 0, %v1693
        %v1695 = vrot.slane %v1692, 4
        %v1696 = vsel %vm327, 0, %v1695
        %v1699 = vunpack.c.l.s4 1983009808
        %v1700 = vunpack.c.0.s8 %v1699
        %v1701 = vperm.slane %v1612, %v1700
        %v1704 = vunpack.c.l.s4 1983009808
        %v1705 = vunpack.c.0.s8 %v1704
        %v1706 = vperm.slane %v1618, %v1705
        %v1707 = vrot.slane %v1706, 4
        %v1708 = vsel %vm327, %v1707, %v1701
        %v1709 = vrot.slane %v1701, 4
        %v1710 = vsel %vm327, %v1706, %v1709
        %v1712 = vunpack.c.l.s4 1934713408
        %v1713 = vunpack.c.0.s8 %v1712
        %v1714 = vperm.slane %v1708, %v1713
        %v1716 = vunpack.c.l.s4 1934713408
        %v1717 = vunpack.c.0.s8 %v1716
        %v1718 = vperm.slane %v1710, %v1717
        %v1719 = vrot.slane %v1714, 4
        %v1720 = vsel %vm327, 0, %v1719
        %v1721 = vrot.slane %v1718, 4
        %v1722 = vsel %vm327, 0, %v1721
        %v1724 = vunpack.c.l.b16 %v1662
        %v1725 = vpack.c.b16 %v1724, %v1724
        %1726 = vrot.lane.b32.xlu0 %v1725, 16
        %v1727 = vpop.permute.xlu0 %1726
        %v1729 = vunpack.c.l.b16 %v1642
        %v1730 = vpack.c.b16 %v1729, %v1729
        %1731 = vrot.lane.b32.xlu0 %v1730, 32
        %v1732 = vpop.permute.xlu0 %1731
        %v1734 = vunpack.c.l.b16 %v1668
        %v1735 = vpack.c.b16 %v1734, %v1734
        %1736 = vrot.lane.b32.xlu0 %v1735, 48
        %v1737 = vpop.permute.xlu0 %1736
        %v1739 = vunpack.c.l.b16 %v1640
        %v1740 = vpack.c.b16 %v1739, %v1739
        %1741 = vrot.lane.b32.xlu0 %v1740, 64
        %v1742 = vpop.permute.xlu0 %1741
        %v1744 = vunpack.c.l.b16 %v1666
        %v1745 = vpack.c.b16 %v1744, %v1744
        %1746 = vrot.lane.b32.xlu0 %v1745, 80
        %v1747 = vpop.permute.xlu0 %1746
        %v1749 = vunpack.c.l.b16 %v1644
        %v1750 = vpack.c.b16 %v1749, %v1749
        %1751 = vrot.lane.b32.xlu0 %v1750, 96
        %v1752 = vpop.permute.xlu0 %1751
        %v1754 = vunpack.c.l.b16 %v1670
        %v1755 = vpack.c.b16 %v1754, %v1754
        %1756 = vrot.lane.b32.xlu0 %v1755, 112
        %v1757 = vpop.permute.xlu0 %1756
        %v1759 = vunpack.c.l.b16 %v1714
        %v1760 = vpack.c.b16 %v1759, %v1759
        %1761 = vrot.lane.b32.xlu0 %v1760, 16
        %v1762 = vpop.permute.xlu0 %1761
        %v1764 = vunpack.c.l.b16 %v1694
        %v1765 = vpack.c.b16 %v1764, %v1764
        %1766 = vrot.lane.b32.xlu0 %v1765, 32
        %v1767 = vpop.permute.xlu0 %1766
        %v1769 = vunpack.c.l.b16 %v1720
        %v1770 = vpack.c.b16 %v1769, %v1769
        %1771 = vrot.lane.b32.xlu0 %v1770, 48
        %v1772 = vpop.permute.xlu0 %1771
        %v1774 = vunpack.c.l.b16 %v1692
        %v1775 = vpack.c.b16 %v1774, %v1774
        %1776 = vrot.lane.b32.xlu0 %v1775, 64
        %v1777 = vpop.permute.xlu0 %1776
        %v1779 = vunpack.c.l.b16 %v1718
        %v1780 = vpack.c.b16 %v1779, %v1779
        %1781 = vrot.lane.b32.xlu0 %v1780, 80
        %v1782 = vpop.permute.xlu0 %1781
        %v1784 = vunpack.c.l.b16 %v1696
        %v1785 = vpack.c.b16 %v1784, %v1784
        %1786 = vrot.lane.b32.xlu0 %v1785, 96
        %v1787 = vpop.permute.xlu0 %1786
        %v1789 = vunpack.c.l.b16 %v1722
        %v1790 = vpack.c.b16 %v1789, %v1789
        %1791 = vrot.lane.b32.xlu0 %v1790, 112
        %v1792 = vpop.permute.xlu0 %1791
        %v1795 = vsel %vm491, %v1636, %v1727
        %v1797 = vsel %vm495, %v1795, %v1732
        %v1799 = vsel %vm498, %v1797, %v1737
        %v1801 = vsel %vm501, %v1799, %v1742
        %v1803 = vsel %vm504, %v1801, %v1747
        %v1805 = vsel %vm507, %v1803, %v1752
        %v1807 = vsel %vm510, %v1805, %v1757
        %v1810 = vsel %vm491, %v1688, %v1762
        %v1812 = vsel %vm495, %v1810, %v1767
        %v1814 = vsel %vm498, %v1812, %v1772
        %v1816 = vsel %vm501, %v1814, %v1777
        %v1818 = vsel %vm504, %v1816, %v1782
        %v1820 = vsel %vm507, %v1818, %v1787
        %v1822 = vsel %vm510, %v1820, %v1792
        %vm1827 = vcmask 1042432
        %vm1828 = vcmask 1046532
        %vm1829 = vmor %vm1827, %vm1828
        %v1830 = vrot.slane %v278, 5
        %v1831 = vrot.slane %v1830, 4
        %v1832 = vrot.slane %v279, 5
        %v1833 = vsel %vm1829, %v1831, %v1832
        %v1834 = vrot.slane %v1832, 4
        %v1835 = vrot.slane %v280, 5
        %v1836 = vsel %vm1829, %v1834, %v1835
        %v1837 = vrot.slane %v281, 5
        %v1838 = vrot.slane %v1837, 4
        %v1839 = vrot.slane %v282, 5
        %v1840 = vsel %vm1829, %v1838, %v1839
        %v1841 = vrot.slane %v1839, 4
        %v1842 = vrot.slane %v283, 5
        %v1843 = vsel %vm1829, %v1841, %v1842
        %v1844 = vrot.slane %v284, 5
        %v1845 = vrot.slane %v1844, 4
        %v1846 = vrot.slane %v285, 5
        %v1847 = vsel %vm1829, %v1845, %v1846
        %v1848 = vrot.slane %v1846, 4
        %v1849 = vrot.slane %v286, 5
        %v1850 = vsel %vm1829, %v1848, %v1849
        %v1851 = vrot.slane %v287, 5
        %v1852 = vrot.slane %v1851, 4
        %v1853 = vrot.slane %v288, 5
        %v1854 = vsel %vm1829, %v1852, %v1853
        %v1855 = vrot.slane %v1853, 4
        %v1856 = vrot.slane %v289, 5
        %v1857 = vsel %vm1829, %v1855, %v1856
        %v1860 = vpack.i.b16 %v1840, %v1833
        %v1861 = vshrl.u32 %v1833, 16
        %v1862 = vshrl.u32 %v1840, 16
        %v1863 = vpack.i.b16 %v1862, %v1861
        %v1866 = vpack.i.b16 %v1854, %v1847
        %v1867 = vshrl.u32 %v1847, 16
        %v1868 = vshrl.u32 %v1854, 16
        %v1869 = vpack.i.b16 %v1868, %v1867
        %v1872 = vpack.i.b16 %v1843, %v1836
        %v1873 = vshrl.u32 %v1836, 16
        %v1874 = vshrl.u32 %v1843, 16
        %v1875 = vpack.i.b16 %v1874, %v1873
        %v1878 = vpack.i.b16 %v1857, %v1850
        %v1879 = vshrl.u32 %v1850, 16
        %v1880 = vshrl.u32 %v1857, 16
        %v1881 = vpack.i.b16 %v1880, %v1879
        %v1884 = vunpack.c.l.s4 1983009808
        %v1885 = vunpack.c.0.s8 %v1884
        %v1886 = vperm.slane %v1860, %v1885
        %v1889 = vunpack.c.l.s4 1983009808
        %v1890 = vunpack.c.0.s8 %v1889
        %v1891 = vperm.slane %v1866, %v1890
        %v1892 = vrot.slane %v1891, 4
        %v1893 = vsel %vm327, %v1892, %v1886
        %v1894 = vrot.slane %v1886, 4
        %v1895 = vsel %vm327, %v1891, %v1894
        %v1897 = vunpack.c.l.s4 1934713408
        %v1898 = vunpack.c.0.s8 %v1897
        %v1899 = vperm.slane %v1893, %v1898
        %v1901 = vunpack.c.l.s4 1934713408
        %v1902 = vunpack.c.0.s8 %v1901
        %v1903 = vperm.slane %v1895, %v1902
        %v1904 = vrot.slane %v1899, 4
        %v1905 = vsel %vm327, 0, %v1904
        %v1906 = vrot.slane %v1903, 4
        %v1907 = vsel %vm327, 0, %v1906
        %v1910 = vunpack.c.l.s4 1983009808
        %v1911 = vunpack.c.0.s8 %v1910
        %v1912 = vperm.slane %v1863, %v1911
        %v1915 = vunpack.c.l.s4 1983009808
        %v1916 = vunpack.c.0.s8 %v1915
        %v1917 = vperm.slane %v1869, %v1916
        %v1918 = vrot.slane %v1917, 4
        %v1919 = vsel %vm327, %v1918, %v1912
        %v1920 = vrot.slane %v1912, 4
        %v1921 = vsel %vm327, %v1917, %v1920
        %v1923 = vunpack.c.l.s4 1934713408
        %v1924 = vunpack.c.0.s8 %v1923
        %v1925 = vperm.slane %v1919, %v1924
        %v1927 = vunpack.c.l.s4 1934713408
        %v1928 = vunpack.c.0.s8 %v1927
        %v1929 = vperm.slane %v1921, %v1928
        %v1930 = vrot.slane %v1925, 4
        %v1931 = vsel %vm327, 0, %v1930
        %v1932 = vrot.slane %v1929, 4
        %v1933 = vsel %vm327, 0, %v1932
        %v1936 = vunpack.c.l.s4 1983009808
        %v1937 = vunpack.c.0.s8 %v1936
        %v1938 = vperm.slane %v1872, %v1937
        %v1941 = vunpack.c.l.s4 1983009808
        %v1942 = vunpack.c.0.s8 %v1941
        %v1943 = vperm.slane %v1878, %v1942
        %v1944 = vrot.slane %v1943, 4
        %v1945 = vsel %vm327, %v1944, %v1938
        %v1946 = vrot.slane %v1938, 4
        %v1947 = vsel %vm327, %v1943, %v1946
        %v1949 = vunpack.c.l.s4 1934713408
        %v1950 = vunpack.c.0.s8 %v1949
        %v1951 = vperm.slane %v1945, %v1950
        %v1953 = vunpack.c.l.s4 1934713408
        %v1954 = vunpack.c.0.s8 %v1953
        %v1955 = vperm.slane %v1947, %v1954
        %v1956 = vrot.slane %v1951, 4
        %v1957 = vsel %vm327, 0, %v1956
        %v1958 = vrot.slane %v1955, 4
        %v1959 = vsel %vm327, 0, %v1958
        %v1962 = vunpack.c.l.s4 1983009808
        %v1963 = vunpack.c.0.s8 %v1962
        %v1964 = vperm.slane %v1875, %v1963
        %v1967 = vunpack.c.l.s4 1983009808
        %v1968 = vunpack.c.0.s8 %v1967
        %v1969 = vperm.slane %v1881, %v1968
        %v1970 = vrot.slane %v1969, 4
        %v1971 = vsel %vm327, %v1970, %v1964
        %v1972 = vrot.slane %v1964, 4
        %v1973 = vsel %vm327, %v1969, %v1972
        %v1975 = vunpack.c.l.s4 1934713408
        %v1976 = vunpack.c.0.s8 %v1975
        %v1977 = vperm.slane %v1971, %v1976
        %v1979 = vunpack.c.l.s4 1934713408
        %v1980 = vunpack.c.0.s8 %v1979
        %v1981 = vperm.slane %v1973, %v1980
        %v1982 = vrot.slane %v1977, 4
        %v1983 = vsel %vm327, 0, %v1982
        %v1984 = vrot.slane %v1981, 4
        %v1985 = vsel %vm327, 0, %v1984
        %v1987 = vunpack.c.l.b16 %v1925
        %v1988 = vpack.c.b16 %v1987, %v1987
        %1989 = vrot.lane.b32.xlu0 %v1988, 16
        %v1990 = vpop.permute.xlu0 %1989
        %v1992 = vunpack.c.l.b16 %v1905
        %v1993 = vpack.c.b16 %v1992, %v1992
        %1994 = vrot.lane.b32.xlu0 %v1993, 32
        %v1995 = vpop.permute.xlu0 %1994
        %v1997 = vunpack.c.l.b16 %v1931
        %v1998 = vpack.c.b16 %v1997, %v1997
        %1999 = vrot.lane.b32.xlu0 %v1998, 48
        %v2000 = vpop.permute.xlu0 %1999
        %v2002 = vunpack.c.l.b16 %v1903
        %v2003 = vpack.c.b16 %v2002, %v2002
        %2004 = vrot.lane.b32.xlu0 %v2003, 64
        %v2005 = vpop.permute.xlu0 %2004
        %v2007 = vunpack.c.l.b16 %v1929
        %v2008 = vpack.c.b16 %v2007, %v2007
        %2009 = vrot.lane.b32.xlu0 %v2008, 80
        %v2010 = vpop.permute.xlu0 %2009
        %v2012 = vunpack.c.l.b16 %v1907
        %v2013 = vpack.c.b16 %v2012, %v2012
        %2014 = vrot.lane.b32.xlu0 %v2013, 96
        %v2015 = vpop.permute.xlu0 %2014
        %v2017 = vunpack.c.l.b16 %v1933
        %v2018 = vpack.c.b16 %v2017, %v2017
        %2019 = vrot.lane.b32.xlu0 %v2018, 112
        %v2020 = vpop.permute.xlu0 %2019
        %v2022 = vunpack.c.l.b16 %v1977
        %v2023 = vpack.c.b16 %v2022, %v2022
        %2024 = vrot.lane.b32.xlu0 %v2023, 16
        %v2025 = vpop.permute.xlu0 %2024
        %v2027 = vunpack.c.l.b16 %v1957
        %v2028 = vpack.c.b16 %v2027, %v2027
        %2029 = vrot.lane.b32.xlu0 %v2028, 32
        %v2030 = vpop.permute.xlu0 %2029
        %v2032 = vunpack.c.l.b16 %v1983
        %v2033 = vpack.c.b16 %v2032, %v2032
        %2034 = vrot.lane.b32.xlu0 %v2033, 48
        %v2035 = vpop.permute.xlu0 %2034
        %v2037 = vunpack.c.l.b16 %v1955
        %v2038 = vpack.c.b16 %v2037, %v2037
        %2039 = vrot.lane.b32.xlu0 %v2038, 64
        %v2040 = vpop.permute.xlu0 %2039
        %v2042 = vunpack.c.l.b16 %v1981
        %v2043 = vpack.c.b16 %v2042, %v2042
        %2044 = vrot.lane.b32.xlu0 %v2043, 80
        %v2045 = vpop.permute.xlu0 %2044
        %v2047 = vunpack.c.l.b16 %v1959
        %v2048 = vpack.c.b16 %v2047, %v2047
        %2049 = vrot.lane.b32.xlu0 %v2048, 96
        %v2050 = vpop.permute.xlu0 %2049
        %v2052 = vunpack.c.l.b16 %v1985
        %v2053 = vpack.c.b16 %v2052, %v2052
        %2054 = vrot.lane.b32.xlu0 %v2053, 112
        %v2055 = vpop.permute.xlu0 %2054
        %v2058 = vsel %vm491, %v1899, %v1990
        %v2060 = vsel %vm495, %v2058, %v1995
        %v2062 = vsel %vm498, %v2060, %v2000
        %v2064 = vsel %vm501, %v2062, %v2005
        %v2066 = vsel %vm504, %v2064, %v2010
        %v2068 = vsel %vm507, %v2066, %v2015
        %v2070 = vsel %vm510, %v2068, %v2020
        %v2073 = vsel %vm491, %v1951, %v2025
        %v2075 = vsel %vm495, %v2073, %v2030
        %v2077 = vsel %vm498, %v2075, %v2035
        %v2079 = vsel %vm501, %v2077, %v2040
        %v2081 = vsel %vm504, %v2079, %v2045
        %v2083 = vsel %vm507, %v2081, %v2050
        %v2085 = vsel %vm510, %v2083, %v2055
        %2086 = vrot.lane.b32.xlu0 %v1833, 127
        %v2087 = vpop.permute.xlu0 %2086
        %2088 = vrot.lane.b32.xlu0 %v1836, 127
        %v2089 = vpop.permute.xlu0 %2088
        %2090 = vrot.lane.b32.xlu0 %v1840, 127
        %v2091 = vpop.permute.xlu0 %2090
        %2092 = vrot.lane.b32.xlu0 %v1843, 127
        %v2093 = vpop.permute.xlu0 %2092
        %2094 = vrot.lane.b32.xlu0 %v1847, 127
        %v2095 = vpop.permute.xlu0 %2094
        %2096 = vrot.lane.b32.xlu0 %v1850, 127
        %v2097 = vpop.permute.xlu0 %2096
        %2098 = vrot.lane.b32.xlu0 %v1854, 127
        %v2099 = vpop.permute.xlu0 %2098
        %2100 = vrot.lane.b32.xlu0 %v1857, 127
        %v2101 = vpop.permute.xlu0 %2100
        %v2104 = vpack.i.b16 %v2091, %v2087
        %v2105 = vshrl.u32 %v2087, 16
        %v2106 = vshrl.u32 %v2091, 16
        %v2107 = vpack.i.b16 %v2106, %v2105
        %v2110 = vpack.i.b16 %v2099, %v2095
        %v2111 = vshrl.u32 %v2095, 16
        %v2112 = vshrl.u32 %v2099, 16
        %v2113 = vpack.i.b16 %v2112, %v2111
        %v2116 = vpack.i.b16 %v2093, %v2089
        %v2117 = vshrl.u32 %v2089, 16
        %v2118 = vshrl.u32 %v2093, 16
        %v2119 = vpack.i.b16 %v2118, %v2117
        %v2122 = vpack.i.b16 %v2101, %v2097
        %v2123 = vshrl.u32 %v2097, 16
        %v2124 = vshrl.u32 %v2101, 16
        %v2125 = vpack.i.b16 %v2124, %v2123
        %v2128 = vunpack.c.l.s4 1983009808
        %v2129 = vunpack.c.0.s8 %v2128
        %v2130 = vperm.slane %v2104, %v2129
        %v2133 = vunpack.c.l.s4 1983009808
        %v2134 = vunpack.c.0.s8 %v2133
        %v2135 = vperm.slane %v2110, %v2134
        %v2136 = vrot.slane %v2135, 4
        %v2137 = vsel %vm327, %v2136, %v2130
        %v2138 = vrot.slane %v2130, 4
        %v2139 = vsel %vm327, %v2135, %v2138
        %v2141 = vunpack.c.l.s4 1934713408
        %v2142 = vunpack.c.0.s8 %v2141
        %v2143 = vperm.slane %v2137, %v2142
        %v2145 = vunpack.c.l.s4 1934713408
        %v2146 = vunpack.c.0.s8 %v2145
        %v2147 = vperm.slane %v2139, %v2146
        %v2148 = vrot.slane %v2143, 4
        %v2149 = vsel %vm327, 0, %v2148
        %v2150 = vrot.slane %v2147, 4
        %v2151 = vsel %vm327, 0, %v2150
        %v2154 = vunpack.c.l.s4 1983009808
        %v2155 = vunpack.c.0.s8 %v2154
        %v2156 = vperm.slane %v2107, %v2155
        %v2159 = vunpack.c.l.s4 1983009808
        %v2160 = vunpack.c.0.s8 %v2159
        %v2161 = vperm.slane %v2113, %v2160
        %v2162 = vrot.slane %v2161, 4
        %v2163 = vsel %vm327, %v2162, %v2156
        %v2164 = vrot.slane %v2156, 4
        %v2165 = vsel %vm327, %v2161, %v2164
        %v2167 = vunpack.c.l.s4 1934713408
        %v2168 = vunpack.c.0.s8 %v2167
        %v2169 = vperm.slane %v2163, %v2168
        %v2171 = vunpack.c.l.s4 1934713408
        %v2172 = vunpack.c.0.s8 %v2171
        %v2173 = vperm.slane %v2165, %v2172
        %v2174 = vrot.slane %v2169, 4
        %v2175 = vsel %vm327, 0, %v2174
        %v2176 = vrot.slane %v2173, 4
        %v2177 = vsel %vm327, 0, %v2176
        %v2180 = vunpack.c.l.s4 1983009808
        %v2181 = vunpack.c.0.s8 %v2180
        %v2182 = vperm.slane %v2116, %v2181
        %v2185 = vunpack.c.l.s4 1983009808
        %v2186 = vunpack.c.0.s8 %v2185
        %v2187 = vperm.slane %v2122, %v2186
        %v2188 = vrot.slane %v2187, 4
        %v2189 = vsel %vm327, %v2188, %v2182
        %v2190 = vrot.slane %v2182, 4
        %v2191 = vsel %vm327, %v2187, %v2190
        %v2193 = vunpack.c.l.s4 1934713408
        %v2194 = vunpack.c.0.s8 %v2193
        %v2195 = vperm.slane %v2189, %v2194
        %v2197 = vunpack.c.l.s4 1934713408
        %v2198 = vunpack.c.0.s8 %v2197
        %v2199 = vperm.slane %v2191, %v2198
        %v2200 = vrot.slane %v2195, 4
        %v2201 = vsel %vm327, 0, %v2200
        %v2202 = vrot.slane %v2199, 4
        %v2203 = vsel %vm327, 0, %v2202
        %v2206 = vunpack.c.l.s4 1983009808
        %v2207 = vunpack.c.0.s8 %v2206
        %v2208 = vperm.slane %v2119, %v2207
        %v2211 = vunpack.c.l.s4 1983009808
        %v2212 = vunpack.c.0.s8 %v2211
        %v2213 = vperm.slane %v2125, %v2212
        %v2214 = vrot.slane %v2213, 4
        %v2215 = vsel %vm327, %v2214, %v2208
        %v2216 = vrot.slane %v2208, 4
        %v2217 = vsel %vm327, %v2213, %v2216
        %v2219 = vunpack.c.l.s4 1934713408
        %v2220 = vunpack.c.0.s8 %v2219
        %v2221 = vperm.slane %v2215, %v2220
        %v2223 = vunpack.c.l.s4 1934713408
        %v2224 = vunpack.c.0.s8 %v2223
        %v2225 = vperm.slane %v2217, %v2224
        %v2226 = vrot.slane %v2221, 4
        %v2227 = vsel %vm327, 0, %v2226
        %v2228 = vrot.slane %v2225, 4
        %v2229 = vsel %vm327, 0, %v2228
        %v2231 = vunpack.c.l.b16 %v2169
        %v2232 = vpack.c.b16 %v2231, %v2231
        %2233 = vrot.lane.b32.xlu0 %v2232, 16
        %v2234 = vpop.permute.xlu0 %2233
        %v2236 = vunpack.c.l.b16 %v2149
        %v2237 = vpack.c.b16 %v2236, %v2236
        %2238 = vrot.lane.b32.xlu0 %v2237, 32
        %v2239 = vpop.permute.xlu0 %2238
        %v2241 = vunpack.c.l.b16 %v2175
        %v2242 = vpack.c.b16 %v2241, %v2241
        %2243 = vrot.lane.b32.xlu0 %v2242, 48
        %v2244 = vpop.permute.xlu0 %2243
        %v2246 = vunpack.c.l.b16 %v2147
        %v2247 = vpack.c.b16 %v2246, %v2246
        %2248 = vrot.lane.b32.xlu0 %v2247, 64
        %v2249 = vpop.permute.xlu0 %2248
        %v2251 = vunpack.c.l.b16 %v2173
        %v2252 = vpack.c.b16 %v2251, %v2251
        %2253 = vrot.lane.b32.xlu0 %v2252, 80
        %v2254 = vpop.permute.xlu0 %2253
        %v2256 = vunpack.c.l.b16 %v2151
        %v2257 = vpack.c.b16 %v2256, %v2256
        %2258 = vrot.lane.b32.xlu0 %v2257, 96
        %v2259 = vpop.permute.xlu0 %2258
        %v2261 = vunpack.c.l.b16 %v2177
        %v2262 = vpack.c.b16 %v2261, %v2261
        %2263 = vrot.lane.b32.xlu0 %v2262, 112
        %v2264 = vpop.permute.xlu0 %2263
        %v2266 = vunpack.c.l.b16 %v2221
        %v2267 = vpack.c.b16 %v2266, %v2266
        %2268 = vrot.lane.b32.xlu0 %v2267, 16
        %v2269 = vpop.permute.xlu0 %2268
        %v2271 = vunpack.c.l.b16 %v2201
        %v2272 = vpack.c.b16 %v2271, %v2271
        %2273 = vrot.lane.b32.xlu0 %v2272, 32
        %v2274 = vpop.permute.xlu0 %2273
        %v2276 = vunpack.c.l.b16 %v2227
        %v2277 = vpack.c.b16 %v2276, %v2276
        %2278 = vrot.lane.b32.xlu0 %v2277, 48
        %v2279 = vpop.permute.xlu0 %2278
        %v2281 = vunpack.c.l.b16 %v2199
        %v2282 = vpack.c.b16 %v2281, %v2281
        %2283 = vrot.lane.b32.xlu0 %v2282, 64
        %v2284 = vpop.permute.xlu0 %2283
        %v2286 = vunpack.c.l.b16 %v2225
        %v2287 = vpack.c.b16 %v2286, %v2286
        %2288 = vrot.lane.b32.xlu0 %v2287, 80
        %v2289 = vpop.permute.xlu0 %2288
        %v2291 = vunpack.c.l.b16 %v2203
        %v2292 = vpack.c.b16 %v2291, %v2291
        %2293 = vrot.lane.b32.xlu0 %v2292, 96
        %v2294 = vpop.permute.xlu0 %2293
        %v2296 = vunpack.c.l.b16 %v2229
        %v2297 = vpack.c.b16 %v2296, %v2296
        %2298 = vrot.lane.b32.xlu0 %v2297, 112
        %v2299 = vpop.permute.xlu0 %2298
        %v2302 = vsel %vm491, %v2143, %v2234
        %v2304 = vsel %vm495, %v2302, %v2239
        %v2306 = vsel %vm498, %v2304, %v2244
        %v2308 = vsel %vm501, %v2306, %v2249
        %v2310 = vsel %vm504, %v2308, %v2254
        %v2312 = vsel %vm507, %v2310, %v2259
        %v2314 = vsel %vm510, %v2312, %v2264
        %v2317 = vsel %vm491, %v2195, %v2269
        %v2319 = vsel %vm495, %v2317, %v2274
        %v2321 = vsel %vm498, %v2319, %v2279
        %v2323 = vsel %vm501, %v2321, %v2284
        %v2325 = vsel %vm504, %v2323, %v2289
        %v2327 = vsel %vm507, %v2325, %v2294
        %v2329 = vsel %vm510, %v2327, %v2299
        %2330 = vrot.lane.b32.xlu0 %v1833, 126
        %v2331 = vpop.permute.xlu0 %2330
        %2332 = vrot.lane.b32.xlu0 %v1836, 126
        %v2333 = vpop.permute.xlu0 %2332
        %2334 = vrot.lane.b32.xlu0 %v1840, 126
        %v2335 = vpop.permute.xlu0 %2334
        %2336 = vrot.lane.b32.xlu0 %v1843, 126
        %v2337 = vpop.permute.xlu0 %2336
        %2338 = vrot.lane.b32.xlu0 %v1847, 126
        %v2339 = vpop.permute.xlu0 %2338
        %2340 = vrot.lane.b32.xlu0 %v1850, 126
        %v2341 = vpop.permute.xlu0 %2340
        %2342 = vrot.lane.b32.xlu0 %v1854, 126
        %v2343 = vpop.permute.xlu0 %2342
        %2344 = vrot.lane.b32.xlu0 %v1857, 126
        %v2345 = vpop.permute.xlu0 %2344
        %v2348 = vpack.i.b16 %v2335, %v2331
        %v2349 = vshrl.u32 %v2331, 16
        %v2350 = vshrl.u32 %v2335, 16
        %v2351 = vpack.i.b16 %v2350, %v2349
        %v2354 = vpack.i.b16 %v2343, %v2339
        %v2355 = vshrl.u32 %v2339, 16
        %v2356 = vshrl.u32 %v2343, 16
        %v2357 = vpack.i.b16 %v2356, %v2355
        %v2360 = vpack.i.b16 %v2337, %v2333
        %v2361 = vshrl.u32 %v2333, 16
        %v2362 = vshrl.u32 %v2337, 16
        %v2363 = vpack.i.b16 %v2362, %v2361
        %v2366 = vpack.i.b16 %v2345, %v2341
        %v2367 = vshrl.u32 %v2341, 16
        %v2368 = vshrl.u32 %v2345, 16
        %v2369 = vpack.i.b16 %v2368, %v2367
        %v2372 = vunpack.c.l.s4 1983009808
        %v2373 = vunpack.c.0.s8 %v2372
        %v2374 = vperm.slane %v2348, %v2373
        %v2377 = vunpack.c.l.s4 1983009808
        %v2378 = vunpack.c.0.s8 %v2377
        %v2379 = vperm.slane %v2354, %v2378
        %v2380 = vrot.slane %v2379, 4
        %v2381 = vsel %vm327, %v2380, %v2374
        %v2382 = vrot.slane %v2374, 4
        %v2383 = vsel %vm327, %v2379, %v2382
        %v2385 = vunpack.c.l.s4 1934713408
        %v2386 = vunpack.c.0.s8 %v2385
        %v2387 = vperm.slane %v2381, %v2386
        %v2389 = vunpack.c.l.s4 1934713408
        %v2390 = vunpack.c.0.s8 %v2389
        %v2391 = vperm.slane %v2383, %v2390
        %v2392 = vrot.slane %v2387, 4
        %v2393 = vsel %vm327, 0, %v2392
        %v2394 = vrot.slane %v2391, 4
        %v2395 = vsel %vm327, 0, %v2394
        %v2398 = vunpack.c.l.s4 1983009808
        %v2399 = vunpack.c.0.s8 %v2398
        %v2400 = vperm.slane %v2351, %v2399
        %v2403 = vunpack.c.l.s4 1983009808
        %v2404 = vunpack.c.0.s8 %v2403
        %v2405 = vperm.slane %v2357, %v2404
        %v2406 = vrot.slane %v2405, 4
        %v2407 = vsel %vm327, %v2406, %v2400
        %v2408 = vrot.slane %v2400, 4
        %v2409 = vsel %vm327, %v2405, %v2408
        %v2411 = vunpack.c.l.s4 1934713408
        %v2412 = vunpack.c.0.s8 %v2411
        %v2413 = vperm.slane %v2407, %v2412
        %v2415 = vunpack.c.l.s4 1934713408
        %v2416 = vunpack.c.0.s8 %v2415
        %v2417 = vperm.slane %v2409, %v2416
        %v2418 = vrot.slane %v2413, 4
        %v2419 = vsel %vm327, 0, %v2418
        %v2420 = vrot.slane %v2417, 4
        %v2421 = vsel %vm327, 0, %v2420
        %v2424 = vunpack.c.l.s4 1983009808
        %v2425 = vunpack.c.0.s8 %v2424
        %v2426 = vperm.slane %v2360, %v2425
        %v2429 = vunpack.c.l.s4 1983009808
        %v2430 = vunpack.c.0.s8 %v2429
        %v2431 = vperm.slane %v2366, %v2430
        %v2432 = vrot.slane %v2431, 4
        %v2433 = vsel %vm327, %v2432, %v2426
        %v2434 = vrot.slane %v2426, 4
        %v2435 = vsel %vm327, %v2431, %v2434
        %v2437 = vunpack.c.l.s4 1934713408
        %v2438 = vunpack.c.0.s8 %v2437
        %v2439 = vperm.slane %v2433, %v2438
        %v2441 = vunpack.c.l.s4 1934713408
        %v2442 = vunpack.c.0.s8 %v2441
        %v2443 = vperm.slane %v2435, %v2442
        %v2444 = vrot.slane %v2439, 4
        %v2445 = vsel %vm327, 0, %v2444
        %v2446 = vrot.slane %v2443, 4
        %v2447 = vsel %vm327, 0, %v2446
        %v2450 = vunpack.c.l.s4 1983009808
        %v2451 = vunpack.c.0.s8 %v2450
        %v2452 = vperm.slane %v2363, %v2451
        %v2455 = vunpack.c.l.s4 1983009808
        %v2456 = vunpack.c.0.s8 %v2455
        %v2457 = vperm.slane %v2369, %v2456
        %v2458 = vrot.slane %v2457, 4
        %v2459 = vsel %vm327, %v2458, %v2452
        %v2460 = vrot.slane %v2452, 4
        %v2461 = vsel %vm327, %v2457, %v2460
        %v2463 = vunpack.c.l.s4 1934713408
        %v2464 = vunpack.c.0.s8 %v2463
        %v2465 = vperm.slane %v2459, %v2464
        %v2467 = vunpack.c.l.s4 1934713408
        %v2468 = vunpack.c.0.s8 %v2467
        %v2469 = vperm.slane %v2461, %v2468
        %v2470 = vrot.slane %v2465, 4
        %v2471 = vsel %vm327, 0, %v2470
        %v2472 = vrot.slane %v2469, 4
        %v2473 = vsel %vm327, 0, %v2472
        %v2475 = vunpack.c.l.b16 %v2413
        %v2476 = vpack.c.b16 %v2475, %v2475
        %2477 = vrot.lane.b32.xlu0 %v2476, 16
        %v2478 = vpop.permute.xlu0 %2477
        %v2480 = vunpack.c.l.b16 %v2393
        %v2481 = vpack.c.b16 %v2480, %v2480
        %2482 = vrot.lane.b32.xlu0 %v2481, 32
        %v2483 = vpop.permute.xlu0 %2482
        %v2485 = vunpack.c.l.b16 %v2419
        %v2486 = vpack.c.b16 %v2485, %v2485
        %2487 = vrot.lane.b32.xlu0 %v2486, 48
        %v2488 = vpop.permute.xlu0 %2487
        %v2490 = vunpack.c.l.b16 %v2391
        %v2491 = vpack.c.b16 %v2490, %v2490
        %2492 = vrot.lane.b32.xlu0 %v2491, 64
        %v2493 = vpop.permute.xlu0 %2492
        %v2495 = vunpack.c.l.b16 %v2417
        %v2496 = vpack.c.b16 %v2495, %v2495
        %2497 = vrot.lane.b32.xlu0 %v2496, 80
        %v2498 = vpop.permute.xlu0 %2497
        %v2500 = vunpack.c.l.b16 %v2395
        %v2501 = vpack.c.b16 %v2500, %v2500
        %2502 = vrot.lane.b32.xlu0 %v2501, 96
        %v2503 = vpop.permute.xlu0 %2502
        %v2505 = vunpack.c.l.b16 %v2421
        %v2506 = vpack.c.b16 %v2505, %v2505
        %2507 = vrot.lane.b32.xlu0 %v2506, 112
        %v2508 = vpop.permute.xlu0 %2507
        %v2510 = vunpack.c.l.b16 %v2465
        %v2511 = vpack.c.b16 %v2510, %v2510
        %2512 = vrot.lane.b32.xlu0 %v2511, 16
        %v2513 = vpop.permute.xlu0 %2512
        %v2515 = vunpack.c.l.b16 %v2445
        %v2516 = vpack.c.b16 %v2515, %v2515
        %2517 = vrot.lane.b32.xlu0 %v2516, 32
        %v2518 = vpop.permute.xlu0 %2517
        %v2520 = vunpack.c.l.b16 %v2471
        %v2521 = vpack.c.b16 %v2520, %v2520
        %2522 = vrot.lane.b32.xlu0 %v2521, 48
        %v2523 = vpop.permute.xlu0 %2522
        %v2525 = vunpack.c.l.b16 %v2443
        %v2526 = vpack.c.b16 %v2525, %v2525
        %2527 = vrot.lane.b32.xlu0 %v2526, 64
        %v2528 = vpop.permute.xlu0 %2527
        %v2530 = vunpack.c.l.b16 %v2469
        %v2531 = vpack.c.b16 %v2530, %v2530
        %2532 = vrot.lane.b32.xlu0 %v2531, 80
        %v2533 = vpop.permute.xlu0 %2532
        %v2535 = vunpack.c.l.b16 %v2447
        %v2536 = vpack.c.b16 %v2535, %v2535
        %2537 = vrot.lane.b32.xlu0 %v2536, 96
        %v2538 = vpop.permute.xlu0 %2537
        %v2540 = vunpack.c.l.b16 %v2473
        %v2541 = vpack.c.b16 %v2540, %v2540
        %2542 = vrot.lane.b32.xlu0 %v2541, 112
        %v2543 = vpop.permute.xlu0 %2542
        %v2546 = vsel %vm491, %v2387, %v2478
        %v2548 = vsel %vm495, %v2546, %v2483
        %v2550 = vsel %vm498, %v2548, %v2488
        %v2552 = vsel %vm501, %v2550, %v2493
        %v2554 = vsel %vm504, %v2552, %v2498
        %v2556 = vsel %vm507, %v2554, %v2503
        %v2558 = vsel %vm510, %v2556, %v2508
        %v2561 = vsel %vm491, %v2439, %v2513
        %v2563 = vsel %vm495, %v2561, %v2518
        %v2565 = vsel %vm498, %v2563, %v2523
        %v2567 = vsel %vm501, %v2565, %v2528
        %v2569 = vsel %vm504, %v2567, %v2533
        %v2571 = vsel %vm507, %v2569, %v2538
        %v2573 = vsel %vm510, %v2571, %v2543
        %v2576 = vrot.slane %v764, 6
        %v2577 = vrot.slane %v779, 6
        %v2580 = vrot.slane %v1008, 4
        %v2581 = vrot.slane %v1023, 4
        %v2584 = vrot.slane %v1319, 2
        %v2585 = vrot.slane %v1334, 2
        %v2588 = vrot.slane %v1807, 6
        %v2589 = vrot.slane %v1822, 6
        %v2592 = vrot.slane %v2070, 4
        %v2593 = vrot.slane %v2085, 4
        %v2596 = vrot.slane %v2314, 2
        %v2597 = vrot.slane %v2329, 2
        %vm2598 = vcmask 1041408
        %v2600 = vsel %vm2598, %v512, %v2576
        %v2602 = vsel %vm2598, %v527, %v2577
        %vm2603 = vcmask 1043456
        %v2605 = vsel %vm2603, %v2600, %v2580
        %v2607 = vsel %vm2603, %v2602, %v2581
        %vm2608 = vcmask 1045504
        %v2610 = vsel %vm2608, %v2605, %v2584
        %v2613 = vsel %vm2608, %v2607, %v2585
        %v2616 = vsel %vm2598, %v1563, %v2588
        %v2618 = vsel %vm2598, %v1578, %v2589
        %v2620 = vsel %vm2603, %v2616, %v2592
        %v2622 = vsel %vm2603, %v2618, %v2593
        %v2624 = vsel %vm2608, %v2620, %v2596
        %v2627 = vsel %vm2608, %v2622, %v2597
        %2630 = vset.pattern.permute.xlu0 0
        %2631 = vperm.xlu0 %2630, %v291
        %v2632 = vpop.permute.xlu0 %2631
        %vm2634 = vcmask 293888
        %v2636 = vsel %vm2634, %v290, 0
        %v2638 = vsel %vm2598, %v2558, 0
        %v2640 = vsel %vm2598, %v2573, 0
        %2642 = vmatpush.bf16.msra.mxu0 0
        %2643 = vmatpush.bf16.msra.mxu0 0
        %2644 = vmatpush.bf16.msra.mxu0 0
        %2645 = vmatpush.bf16.msra.mxu0 0
        %2646 = vmatpush.bf16.msra.mxu0 0
        %2647 = vmatpush.bf16.msra.mxu0 %v2638
        %2648 = vmatpush.bf16.msra.mxu0 %v2624
        %2649 = vmatpush.bf16.msra.mxu0 %v2610
        %2650 = vmatmul.bf16.gmra.mxu0 %v2636
        %v2651 = vpop.f32.mrf.mxu0
        %v2652 = vadd.f32 %v2632, %v2651
        %v2653 = vpop.f32.mrf.mxu0
        %2654 = vdwg.mxu0
        %2655 = vmatpush.bf16.msra.mxu0 0
        %2656 = vmatpush.bf16.msra.mxu0 0
        %2657 = vmatpush.bf16.msra.mxu0 0
        %2658 = vmatpush.bf16.msra.mxu0 0
        %2659 = vmatpush.bf16.msra.mxu0 0
        %2660 = vmatpush.bf16.msra.mxu0 %v2640
        %2661 = vmatpush.bf16.msra.mxu0 %v2627
        %2662 = vmatpush.bf16.msra.mxu0 %v2613
        %2663 = vmatmul.bf16.gmra.mxu0 %v2636
        %v2664 = vpop.f32.mrf.mxu0
        %v2665 = vadd.f32 %v2632, %v2664
        %v2666 = vpop.f32.mrf.mxu0
        %2667 = vdwg.mxu0
        %v2668 = vmax.f32 %v2652, 0.0
        %v2669 = vmax.f32 %v2665, 0.0
        %2670 = vst [vmem:[%s271] sm:$0xff] %v2668
        %2671 = vst [vmem:[%s271 + $0x8] sm:$0xff] %v2669
        %v2672 = vadd.f32 %v2668, %v2669
        %2673 = vadd.xlane.f32.xlu0 %v2672
        %v2674 = vpop.xlane.xlu0 %2673
        %v2675 = vadd.f32 %v2674, 0.0
        %v2676 = vmul.f32 %v2675, 0.00390625
        %v2677 = vld [vmem:[%s3] sm:$0xff]
        %v2678 = vmul.f32 %v2676, %v2677
        %vm2679 = vcmask 15360
        %v2680 = vsel %vm2679, %v2678, 0.0
        %v2681 = vrot.slane %v2680, 4
        %v2682 = vadd.f32 %v2680, %v2681
        %v2683 = vrot.slane %v2682, 2
        %v2684 = vadd.f32 %v2682, %v2683
        %v2685 = vrot.slane %v2684, 1
        %v2686 = vadd.f32 %v2684, %v2685
        %v2687 = vld [vmem:[%s4] sm:$0x1]
        %v2688 = vadd.f32 %v2686, %v2687
        %v2689 = vmax.f32 %v2688, 0.0
        %v2690 = vld [vmem:[%s5] sm:$0xff]
        %v2691 = vperm.slane %v2689, 0
        %v2692 = vmul.f32 %v2690, %v2691
        %v2693 = vsel %vm2679, %v2692, 0.0
        %2694 = vadd.xlane.f32.xlu0 %v2693
        %v2695 = vpop.xlane.xlu0 %2694
        %v2696 = vld [vmem:[%s6] sm:$0xff]
        %v2697 = vadd.f32 %v2695, %v2696
        %v2698 = vsub.f32 0.0, %v2697
        %v2699 = vmul.f32 %v2698, 1.442695
        %v2700 = vpow.pop %v2699
        %v2701 = vadd.f32 %v2700, 1.0
        %v2702 = vrcp.pop %v2701
        %v2703 = vmul.f32 %v2701, %v2702
        %v2704 = vsub.f32 1.0, %v2703
        %v2705 = vmul.f32 %v2702, %v2704
        %v2706 = vadd.f32 %v2702, %v2705
        %vm2707 = vweird.f32 %v2701
        %vm2708 = vweird.f32 %v2702
        %vm2709 = vmor %vm2707, %vm2708
        %v2710 = vsel %vm2709, %v2702, %v2706
        %v2711 = vand.u32 2147483647, %v2701
        %vm2712 = vcmp.eq.f32.partialorder %v2711, 8.507059e+37
        %v2713 = vand.u32 %v2701, 2147483648
        %v2714 = vor.u32 1.1754944e-38, %v2713
        %v2715 = vsel %vm2712, %v2714, %v2710
        %v2716 = vmul.f32 1.0, %v2715
        %v2717 = vld [vmem:[%s271] sm:$0xff]
        %v2718 = vld [vmem:[%s271 + $0x8] sm:$0xff]
        %2720 = vset.pattern.permute.xlu0 0
        %2721 = vperm.xlu0 %2720, %v2716
        %v2722 = vpop.permute.xlu0 %2721
        %v2724 = vmul.f32 %v2717, %v2722
        %v2725 = vmul.f32 %v2718, %v2722
        %2726 = vst [vmem:[%s271] sm:$0xff] %v2724
        %2727 = vst [vmem:[%s271 + $0x8] sm:$0xff] %v2725
        %s2728 = sand.u32 %s181, 1
        %s2729 = scalar_lea.sflag [#allocation3], %s2728
        %s2730 = sand.u32 %s181, 1
        %s2731 = smul.addr %s2730, 16
        %s2732 = scalar_lea.vmem [#allocation2], %s2731
        // Predicated region
        $region49: #{tpu_custom_call.1} parent=47 // pred_check
          %p2733 = pneg %p191
        $region50: #{tpu_custom_call.1} parent=47 // pred_check_branch
          %2735 = sbr.rel (%p2733) target = $region52
        $region51: #{tpu_custom_call.1} parent=47 // pred_region
          %2737 = vsyncadd %s2729, 0
          %s2738 = smul.addr %s21, 2
          %s2739 = smul.addr %s2738, 8
          %s2740 = scalar_lea.hbm %s7, %s2739
          %s2742 = sshll.u32 %s2732, 4
          %s2743 = int_to_ptr.vmem [resolvable:$true] %s2742
          %s2744 = sshll.u32 %s2740, 4
          %s2745 = int_to_ptr.hbm [resolvable:$true] %s2744
          %2747 = dma.vmem_to_hbm [thread:$0]  %s2743, 256, %s2745, %s2729
        $region52: #{tpu_custom_call.1} parent=47 // pred_fallthru
          _
      $region48: #{tpu_custom_call.1} parent=5 // pred_fallthru
        _
      %p2748 = scmp.le.s32.totalorder 2, %s16
      // Predicated region
      $region53: #{tpu_custom_call.1} parent=5 // pred_check
        %p2749 = pneg %p2748
      $region54: #{tpu_custom_call.1} parent=5 // pred_check_branch
        %2751 = sbr.rel (%p2749) target = $region56
      $region55: #{tpu_custom_call.1} parent=5 // pred_region
        %s2752 = ssub.s32 %s16, 2
        // Predicated region
        $region57: #{tpu_custom_call.1} parent=55 // pred_check
          %p2753 = pneg %p197
        $region58: #{tpu_custom_call.1} parent=55 // pred_check_branch
          %2755 = sbr.rel (%p2753) target = $region60
        $region59: #{tpu_custom_call.1} parent=55 // pred_region
          %s2756 = sand.u32 %s182, 1
          %s2757 = scalar_lea.sflag [#allocation3], %s2756
          %s2758 = sand.u32 %s182, 1
          %s2759 = smul.addr %s2758, 16
          %s2760 = scalar_lea.vmem [#allocation2], %s2759
          %2762 = dma.done %s2757, 256
        $region60: #{tpu_custom_call.1} parent=55 // pred_fallthru
          _
      $region56: #{tpu_custom_call.1} parent=5 // pred_fallthru
        _
    $region6: #{tpu_custom_call.1} parent=1 // loop_footer
      %s20 = sadd.s32 1, %s16
    $region7: #{tpu_custom_call.1} parent=1 // loop_footer_branch
      %15 = sbr.rel target = $region3
    $region8: #{tpu_custom_call.1} parent=1 // loop_exit
      _
    %2763 = vsyncpa [#allocation3], 1
    %s2764 = scalar_lea.sflag [#allocation3], 1
    %2765 = vsyncpa %s2764, 1

</llo_original>
